<compile_context>
chip_gen: v6e
topology: v6e:2x2x1
jax: 0.10.0
libtpu: 0.0.40
codegen_flags: <defaults>
</compile_context>

<pallas_src>
import functools
import math

import jax
import jax.numpy as jnp
import numpy as np
from jax.experimental import pallas as pl
from jax.experimental.pallas import tpu as pltpu


# ----------------------------------------------------------------------------
# Single fused kernel: all conv blocks + MLP head.  Runs once per (batch-tile).
# ----------------------------------------------------------------------------
def _fused_cnn_kernel(*refs, num_blocks):
    # refs = [x, Mcat_0, shift_0, ..., Mcat_{L-1}, shift_{L-1}, w1, b1, w2, b2, out]
    #   x:       (N, C0*H*W)        f32   NCHW-flattened input
    #   Mcat_l:  (F_in_l, Q*F_out_l) bf16  conv(+BN scale) matrices, Q pool offsets concat
    #   shift_l: (1, F_out_l)       f32   BN shift incl. conv bias
    #   w1: (F_last, 128) bf16, b1: (1, 128) f32, w2: (128, 128) f32, b2: (1, 128) f32
    #   out: (N, 1) f32
    x_ref = refs[0]
    o_ref = refs[-1]
    w1_ref, b1_ref, w2_ref, b2_ref = refs[1 + 2 * num_blocks:-1]

    act = x_ref[...]                                          # (N, F_in) f32
    for l in range(num_blocks):                               # static unroll over blocks
        m_ref = refs[1 + 2 * l]
        s_ref = refs[2 + 2 * l]
        f_out = s_ref.shape[1]
        nq = m_ref.shape[1] // f_out
        # One lane-dense MXU pass covering ALL pool-window offsets at once.
        y = jnp.dot(act.astype(jnp.bfloat16), m_ref[...],
                    preferred_element_type=jnp.float32)       # (N, Q*F_out) f32
        pooled = y[:, :f_out]
        for q in range(1, nq):                                # max over offsets = max-pool
            pooled = jnp.maximum(pooled, y[:, q * f_out:(q + 1) * f_out])
        act = jnp.maximum(pooled + s_ref[...], 0.0)           # shift once, then ReLU

    h = jnp.dot(act.astype(jnp.bfloat16), w1_ref[...],
                preferred_element_type=jnp.float32) + b1_ref[...]
    h = jnp.maximum(h, 0.0)                                   # (N, 128) lane-dense
    z = jnp.dot(h, w2_ref[...], preferred_element_type=jnp.float32) + b2_ref[...]
    o_ref[...] = jax.nn.sigmoid(z[:, :1]).astype(o_ref.dtype)


# ----------------------------------------------------------------------------
# Host-side (one-time) preprocessing: fold conv weights + BN scale + pool-window
# offsets into dense matrices acting on the NCHW-flattened block input.
# ----------------------------------------------------------------------------
def _conv_pool_block_matrix(w_oihw, scale, shift, h_in, w_in, stride, pad, pool_k, pool_s):
    """Returns (M_cat, shift_row, h_q, w_q) where
       M_cat: (Cin*h_in*w_in, Q*Cout*h_q*w_q), columns [q*F:(q+1)*F] give the BN-scaled
              conv output sampled at pool offset q = (di, dj); zero-padding handled by
              omitting out-of-range taps.
       shift_row: (1, Cout*h_q*w_q) per-column BN shift (incl. conv bias)."""
    c_out, c_in, k, _ = w_oihw.shape
    h_conv = (h_in + 2 * pad - k) // stride + 1
    w_conv = (w_in + 2 * pad - k) // stride + 1
    h_q = (h_conv - pool_k) // pool_s + 1
    w_q = (w_conv - pool_k) // pool_s + 1
    nq = pool_k * pool_k
    f_in = c_in * h_in * w_in
    f_out = c_out * h_q * w_q

    w_folded = w_oihw * scale[:, None, None, None]            # fold BN scale into weights
    m5 = np.zeros((nq, c_in, h_in * w_in, c_out, h_q * w_q), np.float32)
    for q in range(nq):
        di, dj = q // pool_k, q % pool_k
        for a in range(h_q):
            for b in range(w_q):
                col = a * w_q + b
                oh = a * pool_s + di
                ow = b * pool_s + dj
                for kh in range(k):
                    hi = oh * stride + kh - pad
                    if hi < 0 or hi >= h_in:
                        continue
                    for kw in range(k):
                        wi = ow * stride + kw - pad
                        if wi < 0 or wi >= w_in:
                            continue
                        m5[q, :, hi * w_in + wi, :, col] += w_folded[:, :, kh, kw].T
    m = m5.reshape(nq, f_in, f_out)
    m_cat = m.transpose(1, 0, 2).reshape(f_in, nq * f_out)     # concat offsets along cols
    shift_row = np.repeat(shift, h_q * w_q)[None, :]
    return m_cat, shift_row, h_q, w_q


def prepare_kernel_params(params, specs, graph_size, eps=1e-5):
    """One-time, parameter-load-time preprocessing (pure host numpy -> device arrays).
    The result is treated as plain weights by cnn_forward, so nothing here is re-traced
    or re-materialized per forward call."""
    h = w = graph_size
    pk, ps = specs["kernel_size_pool"], specs["stride_pool"]
    ms, shifts = [], []
    for i in range(specs["num_conv_layers"]):
        layer = params["conv"][i]
        gamma = np.asarray(layer["gamma"], np.float32)
        beta = np.asarray(layer["beta"], np.float32)
        mean = np.asarray(layer["mean"], np.float32)
        var = np.asarray(layer["var"], np.float32)
        bias = np.asarray(layer["b"], np.float32)
        scale = gamma / np.sqrt(var + eps)
        shift = beta + (bias - mean) * scale
        m_cat, s_row, h, w = _conv_pool_block_matrix(
            np.asarray(layer["w"], np.float32), scale, shift, h, w,
            specs["stride_conv"][i], specs["padding_conv"][i], pk, ps)
        ms.append(jnp.asarray(m_cat, jnp.bfloat16))            # bf16 weights, f32 accum
        shifts.append(jnp.asarray(s_row, jnp.float32))

    feat = int(shifts[-1].shape[1])
    w1 = np.asarray(params["w1"], np.float32)
    b1 = np.asarray(params["b1"], np.float32)
    w2 = np.asarray(params["w2"], np.float32)
    b2 = np.asarray(params["b2"], np.float32)
    assert w1.shape[0] == feat, (w1.shape, feat)
    l1 = w1.shape[1]
    l1p = max(128, ((l1 + 127) // 128) * 128)                  # lane-pad the MLP head
    w1p = np.zeros((feat, l1p), np.float32); w1p[:, :l1] = w1
    b1p = np.zeros((1, l1p), np.float32);    b1p[:, :l1] = b1
    w2p = np.zeros((l1p, 128), np.float32);  w2p[:l1, 0] = w2[:, 0]
    b2p = np.zeros((1, 128), np.float32);    b2p[0, 0] = b2[0, 0]
    return {
        "m": ms, "shift": shifts,
        "w1": jnp.asarray(w1p, jnp.bfloat16),
        "b1": jnp.asarray(b1p, jnp.float32),
        "w2": jnp.asarray(w2p, jnp.float32),
        "b2": jnp.asarray(b2p, jnp.float32),
    }


# ----------------------------------------------------------------------------
# Forward pass: one pallas_call, activations never leave VMEM.
# ----------------------------------------------------------------------------
def cnn_forward(kparams, x_nchw, *, batch_tile=8):
    n = x_nchw.shape[0]
    num_blocks = len(kparams["m"])
    f_in = kparams["m"][0].shape[0]
    x = x_nchw.reshape(n, f_in).astype(jnp.float32)

    operands = [x]
    for m, s in zip(kparams["m"], kparams["shift"]):
        operands += [m, s]
    operands += [kparams["w1"], kparams["b1"], kparams["w2"], kparams["b2"]]

    kernel = functools.partial(_fused_cnn_kernel, num_blocks=num_blocks)

    mac_cols = sum(int(m.shape[0]) * int(m.shape[1]) for m in kparams["m"])
    mac_cols += int(kparams["w1"].shape[0]) * int(kparams["w1"].shape[1])
    mac_cols += int(kparams["w2"].shape[0]) * int(kparams["w2"].shape[1])
    cost = pl.CostEstimate(
        flops=int(2 * n * mac_cols),
        transcendentals=int(n),                                # final sigmoid
        bytes_accessed=int(sum(op.size * op.dtype.itemsize for op in operands) + n * 4),
    )
    vmem_limit = 32 * 1024 * 1024                              # safe on v5e/v6e/v7x

    if n % batch_tile == 0 and n >= 2 * batch_tile:
        # Batch grid: "parallel" lets v7x spread tiles over its two TensorCores; weights
        # keep the same block every step (no re-fetch).  Gated off at toy batch sizes.
        def whole(arr):
            zeros = (0,) * arr.ndim
            return pl.BlockSpec(arr.shape, lambda i: zeros)
        in_specs = [pl.BlockSpec((batch_tile, f_in), lambda i: (i, 0))]
        in_specs += [whole(op) for op in operands[1:]]
        out_specs = pl.BlockSpec((batch_tile, 1), lambda i: (i, 0))
        call = pl.pallas_call(
            kernel,
            out_shape=jax.ShapeDtypeStruct((n, 1), jnp.float32),
            grid=(n // batch_tile,),
            in_specs=in_specs,
            out_specs=out_specs,
            cost_estimate=cost,
            compiler_params=pltpu.CompilerParams(
                dimension_semantics=("parallel",), vmem_limit_bytes=vmem_limit),
        )
    else:
        vmem = pl.BlockSpec(memory_space=pltpu.MemorySpace.VMEM)
        call = pl.pallas_call(
            kernel,
            out_shape=jax.ShapeDtypeStruct((n, 1), jnp.float32),
            in_specs=[vmem] * len(operands),
            out_specs=vmem,
            cost_estimate=cost,
            compiler_params=pltpu.CompilerParams(vmem_limit_bytes=vmem_limit),
        )
    return call(*operands)


# ----------------------------------------------------------------------------
# Parameter init (deterministic, PyTorch-like shapes: conv weights in OIHW).
# ----------------------------------------------------------------------------
def _feature_size(specs, graph_size):
    h = w = graph_size
    for i in range(specs["num_conv_layers"]):
        k = specs["kernel_size_conv"][i]
        s = specs["stride_conv"][i]
        p = specs["padding_conv"][i]
        h = (h + 2 * p - k) // s + 1
        w = (w + 2 * p - k) // s + 1
        h = (h - specs["kernel_size_pool"]) // specs["stride_pool"] + 1
        w = (w - specs["kernel_size_pool"]) // specs["stride_pool"] + 1
    return h * w * specs[f"c{specs['num_conv_layers']}"]


def init_params(key, specs, graph_size):
    params = {"conv": []}
    for i in range(specs["num_conv_layers"]):
        cin, cout = specs[f"c{i}"], specs[f"c{i + 1}"]
        k = specs["kernel_size_conv"][i]
        key, kw_, kb_ = jax.random.split(key, 3)
        bound = 1.0 / math.sqrt(cin * k * k)
        params["conv"].append(
            {
                "w": jax.random.uniform(kw_, (cout, cin, k, k), jnp.float32, -bound, bound),
                "b": jax.random.uniform(kb_, (cout,), jnp.float32, -bound, bound),
                "gamma": jnp.ones((cout,), jnp.float32),
                "beta": jnp.zeros((cout,), jnp.float32),
                "mean": jnp.zeros((cout,), jnp.float32),
                "var": jnp.ones((cout,), jnp.float32),
            }
        )
    feat = _feature_size(specs, graph_size)
    l1 = specs["l1"]
    key, k1, k1b, k2, k2b = jax.random.split(key, 5)
    b1_bound = 1.0 / math.sqrt(feat)
    b2_bound = 1.0 / math.sqrt(l1)
    params["w1"] = jax.random.uniform(k1, (feat, l1), jnp.float32, -b1_bound, b1_bound)
    params["b1"] = jax.random.uniform(k1b, (1, l1), jnp.float32, -b1_bound, b1_bound)
    params["w2"] = jax.random.uniform(k2, (l1, 1), jnp.float32, -b2_bound, b2_bound)
    params["b2"] = jax.random.uniform(k2b, (1, 1), jnp.float32, -b2_bound, b2_bound)
    return params


# ----------------------------------------------------------------------------
# References for validation.
# ----------------------------------------------------------------------------
def fused_reference(kparams, x_nchw):
    """Plain-XLA implementation of exactly the kernel math (same bf16 casts)."""
    n = x_nchw.shape[0]
    act = x_nchw.reshape(n, -1).astype(jnp.float32)
    for m, s in zip(kparams["m"], kparams["shift"]):
        f_out = s.shape[1]
        y = jnp.dot(act.astype(jnp.bfloat16), m, preferred_element_type=jnp.float32)
        nq = y.shape[1] // f_out
        pooled = y[:, :f_out]
        for q in range(1, nq):
            pooled = jnp.maximum(pooled, y[:, q * f_out:(q + 1) * f_out])
        act = jnp.maximum(pooled + s, 0.0)
    h = jnp.maximum(
        jnp.dot(act.astype(jnp.bfloat16), kparams["w1"],
                preferred_element_type=jnp.float32) + kparams["b1"], 0.0)
    z = jnp.dot(h, kparams["w2"], preferred_element_type=jnp.float32) + kparams["b2"]
    return jax.nn.sigmoid(z[:, :1])


def reference_forward(params, x_nchw, specs):
    """True-semantics f32 reference: conv -> BN(eval) -> ReLU -> maxpool -> MLP."""
    eps = 1e-5
    pk, ps = specs["kernel_size_pool"], specs["stride_pool"]
    y = x_nchw.astype(jnp.float32)
    for i in range(specs["num_conv_layers"]):
        layer = params["conv"][i]
        p = specs["padding_conv"][i]
        y = jax.lax.conv_general_dilated(
            y, layer["w"],
            window_strides=(specs["stride_conv"][i],) * 2,
            padding=[(p, p), (p, p)],
            dimension_numbers=("NCHW", "OIHW", "NCHW"),
            precision=jax.lax.Precision.HIGHEST,
        )
        y = y + layer["b"][None, :, None, None]
        scale = (layer["gamma"] / jnp.sqrt(layer["var"] + eps))[None, :, None, None]
        y = (y - layer["mean"][None, :, None, None]) * scale + layer["beta"][None, :, None, None]
        y = jnp.maximum(y, 0.0)
        y = jax.lax.reduce_window(
            y, -jnp.inf, jax.lax.max, (1, 1, pk, pk), (1, 1, ps, ps), "VALID")
    y = y.reshape(y.shape[0], -1)
    y = jnp.maximum(
        jnp.dot(y, params["w1"], precision=jax.lax.Precision.HIGHEST) + params["b1"], 0.0)
    y = jnp.dot(y, params["w2"], precision=jax.lax.Precision.HIGHEST) + params["b2"]
    return jax.nn.sigmoid(y)


if __name__ == "__main__":
    architecture_specs = {
        "num_conv_layers": 2,
        "c0": 1,
        "c1": 4,
        "c2": 8,
        "kernel_size_conv": [3, 3],
        "stride_conv": [1, 1],
        "padding_conv": [1, 1],
        "kernel_size_pool": 2,
        "stride_pool": 2,
        "dropout_prob": 0.5,
        "l1": 32,
    }
    graph_size = 16
    batch = 2

    key = jax.random.PRNGKey(0)
    kp, kx, kx2 = jax.random.split(key, 3)
    params = init_params(kp, architecture_specs, graph_size)

    # One-time preprocessing (parameter-load time), hoisted out of the forward.
    kernel_params = prepare_kernel_params(params, architecture_specs, graph_size)

    # Bernoulli-like 0/1 input, matching torch.bernoulli(torch.rand(...)) spirit.
    x = (jax.random.uniform(
        kx, (batch, architecture_specs["c0"], graph_size, graph_size)) > 0.5
         ).astype(jnp.float32)

    fwd = jax.jit(cnn_forward)

    # --- small batch: gridless single-invocation path --------------------------------
    out = jax.block_until_ready(fwd(kernel_params, x))
    assert out.shape == (batch, 1)
    assert bool(jnp.all((out >= 0.0) & (out <= 1.0)))
    ref_f = jax.block_until_ready(fused_reference(kernel_params, x))
    assert bool(jnp.allclose(out, ref_f, atol=5e-3, rtol=0.0)), (out, ref_f)
    ref_t = jax.block_until_ready(reference_forward(params, x, architecture_specs))
    # looser tolerance: covers bf16 weight/activation quantization on the MXU dots
    assert bool(jnp.allclose(out, ref_t, atol=2e-2, rtol=0.0)), (out, ref_t)

    # --- larger batch: exercises the parallel batch-grid path (v7x dual-TC) ----------
    batch_big = 16
    x_big = (jax.random.uniform(
        kx2, (batch_big, architecture_specs["c0"], graph_size, graph_size)) > 0.5
             ).astype(jnp.float32)
    out_big = jax.block_until_ready(fwd(kernel_params, x_big))
    assert out_big.shape == (batch_big, 1)
    ref_f_big = jax.block_until_ready(fused_reference(kernel_params, x_big))
    assert bool(jnp.allclose(out_big, ref_f_big, atol=5e-3, rtol=0.0)), (out_big, ref_f_big)
    ref_t_big = jax.block_until_ready(reference_forward(params, x_big, architecture_specs))
    assert bool(jnp.allclose(out_big, ref_t_big, atol=2e-2, rtol=0.0)), (out_big, ref_t_big)

    print("KERNEL_OK")
</pallas_src>

<mosaic_0001>
module attributes {stable_mosaic.version = 11 : i64} {
  func.func @_fused_cnn_kernel(%arg0: memref<2x256xf32, #tpu.memory_space<vmem>>, %arg1: memref<256x1024xbf16, #tpu.memory_space<vmem>>, %arg2: memref<1x256xf32, #tpu.memory_space<vmem>>, %arg3: memref<256x512xbf16, #tpu.memory_space<vmem>>, %arg4: memref<1x128xf32, #tpu.memory_space<vmem>>, %arg5: memref<128x128xbf16, #tpu.memory_space<vmem>>, %arg6: memref<1x128xf32, #tpu.memory_space<vmem>>, %arg7: memref<128x128xf32, #tpu.memory_space<vmem>>, %arg8: memref<1x128xf32, #tpu.memory_space<vmem>>, %arg9: memref<2x1xf32, #tpu.memory_space<vmem>>) attributes {dimension_semantics = [], scalar_prefetch = 0 : i64, scratch_operands = 0 : i64, tpu.core_type = #tpu.core_type<tc>} {
    %c0 = arith.constant 0 : index
    %c0_0 = arith.constant 0 : index
    %0 = vector.load %arg0[%c0, %c0_0] : memref<2x256xf32, #tpu.memory_space<vmem>>, vector<2x256xf32>
    %1 = arith.truncf %0 : vector<2x256xf32> to vector<2x256xbf16>
    %c0_1 = arith.constant 0 : index
    %c0_2 = arith.constant 0 : index
    %2 = vector.load %arg1[%c0_1, %c0_2] : memref<256x1024xbf16, #tpu.memory_space<vmem>>, vector<256x1024xbf16>
    %cst = arith.constant dense<0.000000e+00> : vector<2x1024xf32>
    %3 = tpu.matmul %1, %2, %cst {dimension_numbers = #tpu.dot_dimension_numbers<[1], [0], [0], [1], [0, 0, 1, 1], [], []>} : vector<2x256xbf16>, vector<256x1024xbf16>, vector<2x1024xf32> -> vector<2x1024xf32>
    %4 = vector.extract_strided_slice %3 {offsets = [0, 0], sizes = [2, 256], strides = [1, 1]} : vector<2x1024xf32> to vector<2x256xf32>
    %5 = vector.extract_strided_slice %3 {offsets = [0, 256], sizes = [2, 256], strides = [1, 1]} : vector<2x1024xf32> to vector<2x256xf32>
    %6 = arith.maximumf %4, %5 : vector<2x256xf32>
    %7 = vector.extract_strided_slice %3 {offsets = [0, 512], sizes = [2, 256], strides = [1, 1]} : vector<2x1024xf32> to vector<2x256xf32>
    %8 = arith.maximumf %6, %7 : vector<2x256xf32>
    %9 = vector.extract_strided_slice %3 {offsets = [0, 768], sizes = [2, 256], strides = [1, 1]} : vector<2x1024xf32> to vector<2x256xf32>
    %10 = arith.maximumf %8, %9 : vector<2x256xf32>
    %c0_3 = arith.constant 0 : index
    %c0_4 = arith.constant 0 : index
    %11 = vector.load %arg2[%c0_3, %c0_4] : memref<1x256xf32, #tpu.memory_space<vmem>>, vector<1x256xf32>
    %12 = vector.broadcast %11 : vector<1x256xf32> to vector<2x256xf32>
    %13 = arith.addf %10, %12 : vector<2x256xf32>
    %cst_5 = arith.constant 0.000000e+00 : f32
    %14 = vector.broadcast %cst_5 : f32 to vector<2x256xf32>
    %15 = arith.maximumf %13, %14 : vector<2x256xf32>
    %16 = arith.truncf %15 : vector<2x256xf32> to vector<2x256xbf16>
    %c0_6 = arith.constant 0 : index
    %c0_7 = arith.constant 0 : index
    %17 = vector.load %arg3[%c0_6, %c0_7] : memref<256x512xbf16, #tpu.memory_space<vmem>>, vector<256x512xbf16>
    %cst_8 = arith.constant dense<0.000000e+00> : vector<2x512xf32>
    %18 = tpu.matmul %16, %17, %cst_8 {dimension_numbers = #tpu.dot_dimension_numbers<[1], [0], [0], [1], [0, 0, 1, 1], [], []>} : vector<2x256xbf16>, vector<256x512xbf16>, vector<2x512xf32> -> vector<2x512xf32>
    %19 = vector.extract_strided_slice %18 {offsets = [0, 0], sizes = [2, 128], strides = [1, 1]} : vector<2x512xf32> to vector<2x128xf32>
    %20 = vector.extract_strided_slice %18 {offsets = [0, 128], sizes = [2, 128], strides = [1, 1]} : vector<2x512xf32> to vector<2x128xf32>
    %21 = arith.maximumf %19, %20 : vector<2x128xf32>
    %22 = vector.extract_strided_slice %18 {offsets = [0, 256], sizes = [2, 128], strides = [1, 1]} : vector<2x512xf32> to vector<2x128xf32>
    %23 = arith.maximumf %21, %22 : vector<2x128xf32>
    %24 = vector.extract_strided_slice %18 {offsets = [0, 384], sizes = [2, 128], strides = [1, 1]} : vector<2x512xf32> to vector<2x128xf32>
    %25 = arith.maximumf %23, %24 : vector<2x128xf32>
    %c0_9 = arith.constant 0 : index
    %c0_10 = arith.constant 0 : index
    %26 = vector.load %arg4[%c0_9, %c0_10] : memref<1x128xf32, #tpu.memory_space<vmem>>, vector<1x128xf32>
    %27 = vector.broadcast %26 : vector<1x128xf32> to vector<2x128xf32>
    %28 = arith.addf %25, %27 : vector<2x128xf32>
    %cst_11 = arith.constant 0.000000e+00 : f32
    %29 = vector.broadcast %cst_11 : f32 to vector<2x128xf32>
    %30 = arith.maximumf %28, %29 : vector<2x128xf32>
    %31 = arith.truncf %30 : vector<2x128xf32> to vector<2x128xbf16>
    %c0_12 = arith.constant 0 : index
    %c0_13 = arith.constant 0 : index
    %32 = vector.load %arg5[%c0_12, %c0_13] : memref<128x128xbf16, #tpu.memory_space<vmem>>, vector<128x128xbf16>
    %cst_14 = arith.constant dense<0.000000e+00> : vector<2x128xf32>
    %33 = tpu.matmul %31, %32, %cst_14 {dimension_numbers = #tpu.dot_dimension_numbers<[1], [0], [0], [1], [0, 0, 1, 1], [], []>} : vector<2x128xbf16>, vector<128x128xbf16>, vector<2x128xf32> -> vector<2x128xf32>
    %c0_15 = arith.constant 0 : index
    %c0_16 = arith.constant 0 : index
    %34 = vector.load %arg6[%c0_15, %c0_16] : memref<1x128xf32, #tpu.memory_space<vmem>>, vector<1x128xf32>
    %35 = vector.broadcast %34 : vector<1x128xf32> to vector<2x128xf32>
    %36 = arith.addf %33, %35 : vector<2x128xf32>
    %cst_17 = arith.constant 0.000000e+00 : f32
    %37 = vector.broadcast %cst_17 : f32 to vector<2x128xf32>
    %38 = arith.maximumf %36, %37 : vector<2x128xf32>
    %c0_18 = arith.constant 0 : index
    %c0_19 = arith.constant 0 : index
    %39 = vector.load %arg7[%c0_18, %c0_19] : memref<128x128xf32, #tpu.memory_space<vmem>>, vector<128x128xf32>
    %cst_20 = arith.constant dense<0.000000e+00> : vector<2x128xf32>
    %40 = tpu.matmul %38, %39, %cst_20 {dimension_numbers = #tpu.dot_dimension_numbers<[1], [0], [0], [1], [0, 0, 1, 1], [], []>} : vector<2x128xf32>, vector<128x128xf32>, vector<2x128xf32> -> vector<2x128xf32>
    %c0_21 = arith.constant 0 : index
    %c0_22 = arith.constant 0 : index
    %41 = vector.load %arg8[%c0_21, %c0_22] : memref<1x128xf32, #tpu.memory_space<vmem>>, vector<1x128xf32>
    %42 = vector.broadcast %41 : vector<1x128xf32> to vector<2x128xf32>
    %43 = arith.addf %40, %42 : vector<2x128xf32>
    %44 = vector.extract_strided_slice %43 {offsets = [0, 0], sizes = [2, 1], strides = [1, 1]} : vector<2x128xf32> to vector<2x1xf32>
    %45 = arith.negf %44 : vector<2x1xf32>
    %46 = math.exp %45 : vector<2x1xf32>
    %cst_23 = arith.constant 1.000000e+00 : f32
    %47 = vector.broadcast %cst_23 : f32 to vector<2x1xf32>
    %48 = arith.addf %47, %46 : vector<2x1xf32>
    %49 = arith.divf %47, %48 : vector<2x1xf32>
    %c0_24 = arith.constant 0 : index
    %c0_25 = arith.constant 0 : index
    %50 = vector.load %arg9[%c0_24, %c0_25] : memref<2x1xf32, #tpu.memory_space<vmem>>, vector<2x1xf32>
    tpu.vector_store %arg9[%c0_24, %c0_25], %49 {strides = array<i32>} : memref<2x1xf32, #tpu.memory_space<vmem>>, vector<2x1xf32>,
    return
  }
}

</mosaic_0001>

<llo_original>
// kernel: cnn_forward.1
$region0: #{cnn_forward.1}
  #allocation0 [shape = 'u32[]', space=smem, size = 0x4, offset = 0x4, fixed_abs, tag = 'smem constant byte address 0x4 - core index']
  #allocation1 [shape = 'u32[144,128]{1,0:T(1,128)}', space=vmem, size = 0x12000, scoped, tag = 'internal scratch']
  %s0 = inlined_call_operand.vmem [shape: f32[2,256], index: 0, kind: input, shape index: {}]
  %s1 = inlined_call_operand.hbm [shape: bf16[256,1024], index: 1, kind: input, shape index: {}]
  %s2 = inlined_call_operand.vmem [shape: f32[1,256], index: 2, kind: input, shape index: {}]
  %s3 = inlined_call_operand.hbm [shape: bf16[256,512], index: 3, kind: input, shape index: {}]
  %s4 = inlined_call_operand.vmem [shape: f32[1,128], index: 4, kind: input, shape index: {}]
  %s5 = inlined_call_operand.hbm [shape: bf16[128,128], index: 5, kind: input, shape index: {}]
  %s6 = inlined_call_operand.vmem [shape: f32[1,128], index: 6, kind: input, shape index: {}]
  %s7 = inlined_call_operand.hbm [shape: f32[128,128], index: 7, kind: input, shape index: {}]
  %s8 = inlined_call_operand.vmem [shape: f32[1,128], index: 8, kind: input, shape index: {}]
  %s9 = inlined_call_operand.vmem [shape: f32[2,1], index: 9, kind: output, shape index: {}]
  %s10 = sld [smem:[#allocation0]]
  $region62: #{cnn_forward.1} parent=0
    _
  %s12 = ssub.s32 1, %s10
  %s13 = scalar_select 0, %s12, %s10
  $region1: #{cnn_forward.1} parent=0
    #allocation2 [shape = 'u8[524288]{0}', space=vmem, size = 0x80000, scoped, tag = 'input window, operand 1, single buffered']
    #allocation3 [shape = 's32[1]{0}', space=sflag, size = 0x4, scoped, tag = 'scoped memory for cnn_forward.1']
    #allocation4 [shape = 'u8[262144]{0}', space=vmem, size = 0x40000, scoped, tag = 'input window, operand 3, single buffered']
    #allocation5 [shape = 's32[1]{0}', space=sflag, size = 0x4, scoped, tag = 'scoped memory for cnn_forward.1']
    #allocation6 [shape = 'u8[32768]{0}', space=vmem, size = 0x8000, scoped, tag = 'input window, operand 5, single buffered']
    #allocation7 [shape = 'u8[65536]{0}', space=vmem, size = 0x10000, scoped, tag = 'input window, operand 7, single buffered']
    #allocation8 [shape = 's32[1]{0}', space=sflag, size = 0x4, scoped, tag = 'scoped memory for cnn_forward.1']
    %14 = vsyncpa [#allocation3], 0
    %15 = vsyncpa [#allocation5], 0
    %16 = vsyncpa [#allocation8], 0
    // Predicated region
    $region2: #{cnn_forward.1} parent=1 // pred_check
      _
    $region3: #{cnn_forward.1} parent=1 // pred_check_branch
      %18 = sbr.rel (0) target = $region5
    $region4: #{cnn_forward.1} parent=1 // pred_region
      _
    $region5: #{cnn_forward.1} parent=1 // pred_fallthru
      _
    // Predicated region
    $region6: #{cnn_forward.1} parent=1 // pred_check
      _
    $region7: #{cnn_forward.1} parent=1 // pred_check_branch
      %20 = sbr.rel (0) target = $region9
    $region8: #{cnn_forward.1} parent=1 // pred_region
      %s22 = ssub.s32 16384, 16384
      %23 = vsyncadd [#allocation3], %s22
      %s24 = sshll.u32 [#allocation2], 4
      %s25 = int_to_ptr.vmem [resolvable:$true] %s24
      %30 = dma.hbm_to_vmem [thread:$0]  %s1, 16384, %s25, [#allocation3], 512, 512, 32
    $region9: #{cnn_forward.1} parent=1 // pred_fallthru
      _
    // Predicated region
    $region10: #{cnn_forward.1} parent=1 // pred_check
      _
    $region11: #{cnn_forward.1} parent=1 // pred_check_branch
      %32 = sbr.rel (0) target = $region13
    $region12: #{cnn_forward.1} parent=1 // pred_region
      _
    $region13: #{cnn_forward.1} parent=1 // pred_fallthru
      _
    // Predicated region
    $region14: #{cnn_forward.1} parent=1 // pred_check
      _
    $region15: #{cnn_forward.1} parent=1 // pred_check_branch
      %34 = sbr.rel (0) target = $region17
    $region16: #{cnn_forward.1} parent=1 // pred_region
      %s36 = ssub.s32 8192, 8192
      %37 = vsyncadd [#allocation5], %s36
      %s38 = sshll.u32 [#allocation4], 4
      %s39 = int_to_ptr.vmem [resolvable:$true] %s38
      %44 = dma.hbm_to_vmem [thread:$0]  %s3, 8192, %s39, [#allocation5], 256, 256, 16
    $region17: #{cnn_forward.1} parent=1 // pred_fallthru
      _
    // Predicated region
    $region18: #{cnn_forward.1} parent=1 // pred_check
      _
    $region19: #{cnn_forward.1} parent=1 // pred_check_branch
      %46 = sbr.rel (0) target = $region21
    $region20: #{cnn_forward.1} parent=1 // pred_region
      _
    $region21: #{cnn_forward.1} parent=1 // pred_fallthru
      _
    // Predicated region
    $region22: #{cnn_forward.1} parent=1 // pred_check
      _
    $region23: #{cnn_forward.1} parent=1 // pred_check_branch
      %48 = sbr.rel (0) target = $region25
    $region24: #{cnn_forward.1} parent=1 // pred_region
      %s50 = ssub.s32 1024, 1024
      %51 = vsyncadd [#allocation5], %s50
      %s52 = sshll.u32 [#allocation6], 4
      %s53 = int_to_ptr.vmem [resolvable:$true] %s52
      %58 = dma.hbm_to_vmem [thread:$0]  %s5, 1024, %s53, [#allocation5], 64, 64, 4
    $region25: #{cnn_forward.1} parent=1 // pred_fallthru
      _
    // Predicated region
    $region26: #{cnn_forward.1} parent=1 // pred_check
      _
    $region27: #{cnn_forward.1} parent=1 // pred_check_branch
      %60 = sbr.rel (0) target = $region29
    $region28: #{cnn_forward.1} parent=1 // pred_region
      _
    $region29: #{cnn_forward.1} parent=1 // pred_fallthru
      _
    // Predicated region
    $region30: #{cnn_forward.1} parent=1 // pred_check
      _
    $region31: #{cnn_forward.1} parent=1 // pred_check_branch
      %62 = sbr.rel (0) target = $region33
    $region32: #{cnn_forward.1} parent=1 // pred_region
      %s64 = ssub.s32 2048, 2048
      %65 = vsyncadd [#allocation8], %s64
      %s66 = sshll.u32 [#allocation7], 4
      %s67 = int_to_ptr.vmem [resolvable:$true] %s66
      %72 = dma.hbm_to_vmem [thread:$0]  %s7, 2048, %s67, [#allocation8], 128, 128, 8
    $region33: #{cnn_forward.1} parent=1 // pred_fallthru
      _
    // Predicated region
    $region34: #{cnn_forward.1} parent=1 // pred_check
      _
    $region35: #{cnn_forward.1} parent=1 // pred_check_branch
      %74 = sbr.rel (0) target = $region37
    $region36: #{cnn_forward.1} parent=1 // pred_region
      _
    $region37: #{cnn_forward.1} parent=1 // pred_fallthru
      _
    // Predicated region
    $region38: #{cnn_forward.1} parent=1 // pred_check
      _
    $region39: #{cnn_forward.1} parent=1 // pred_check_branch
      %76 = sbr.rel (0) target = $region41
    $region40: #{cnn_forward.1} parent=1 // pred_region
      %77 = dma.done [#allocation3], 16384
    $region41: #{cnn_forward.1} parent=1 // pred_fallthru
      _
    // Predicated region
    $region42: #{cnn_forward.1} parent=1 // pred_check
      _
    $region43: #{cnn_forward.1} parent=1 // pred_check_branch
      %79 = sbr.rel (0) target = $region45
    $region44: #{cnn_forward.1} parent=1 // pred_region
      %80 = dma.done [#allocation5], 8192
    $region45: #{cnn_forward.1} parent=1 // pred_fallthru
      _
    // Predicated region
    $region46: #{cnn_forward.1} parent=1 // pred_check
      _
    $region47: #{cnn_forward.1} parent=1 // pred_check_branch
      %82 = sbr.rel (0) target = $region49
    $region48: #{cnn_forward.1} parent=1 // pred_region
      %83 = dma.done [#allocation5], 1024
    $region49: #{cnn_forward.1} parent=1 // pred_fallthru
      _
    // Predicated region
    $region50: #{cnn_forward.1} parent=1 // pred_check
      _
    $region51: #{cnn_forward.1} parent=1 // pred_check_branch
      %85 = sbr.rel (0) target = $region53
    $region52: #{cnn_forward.1} parent=1 // pred_region
      %86 = dma.done [#allocation8], 2048
    $region53: #{cnn_forward.1} parent=1 // pred_fallthru
      _
    %v88 = vld [vmem:[%s0] sm:$0xf]
    %v91 = vunpack.c.l.s4 1983009808
    %v92 = vunpack.c.0.s8 %v91
    %v93 = vlaneseq
    %v94 = vshrl.u32 %v93, 7
    %v95 = vsub.s32 %v92, %v94
    %v96 = vrot.slane %v88, %v95
    %v97 = vcombine.high %v96, %v96
    %v100 = vpack.c.bf16 %v96, %v96
    %v101 = vpack.c.bf16 %v97, %v97
    %v102 = vld [vmem:[#allocation2] sm:$0xff]
    %v103 = vld [vmem:[#allocation2 + $0x8] sm:$0xff]
    %v104 = vld [vmem:[#allocation2 + $0x10] sm:$0xff]
    %v105 = vld [vmem:[#allocation2 + $0x18] sm:$0xff]
    %v106 = vld [vmem:[#allocation2 + $0x20] sm:$0xff]
    %v107 = vld [vmem:[#allocation2 + $0x28] sm:$0xff]
    %v108 = vld [vmem:[#allocation2 + $0x30] sm:$0xff]
    %v109 = vld [vmem:[#allocation2 + $0x38] sm:$0xff]
    %v110 = vld [vmem:[#allocation2 + $0x40] sm:$0xff]
    %v111 = vld [vmem:[#allocation2 + $0x48] sm:$0xff]
    %v112 = vld [vmem:[#allocation2 + $0x50] sm:$0xff]
    %v113 = vld [vmem:[#allocation2 + $0x58] sm:$0xff]
    %v114 = vld [vmem:[#allocation2 + $0x60] sm:$0xff]
    %v115 = vld [vmem:[#allocation2 + $0x68] sm:$0xff]
    %v116 = vld [vmem:[#allocation2 + $0x70] sm:$0xff]
    %v117 = vld [vmem:[#allocation2 + $0x78] sm:$0xff]
    %v118 = vld [vmem:[#allocation2 + $0x80] sm:$0xff]
    %v119 = vld [vmem:[#allocation2 + $0x88] sm:$0xff]
    %v120 = vld [vmem:[#allocation2 + $0x90] sm:$0xff]
    %v121 = vld [vmem:[#allocation2 + $0x98] sm:$0xff]
    %v122 = vld [vmem:[#allocation2 + $0xa0] sm:$0xff]
    %v123 = vld [vmem:[#allocation2 + $0xa8] sm:$0xff]
    %v124 = vld [vmem:[#allocation2 + $0xb0] sm:$0xff]
    %v125 = vld [vmem:[#allocation2 + $0xb8] sm:$0xff]
    %v126 = vld [vmem:[#allocation2 + $0xc0] sm:$0xff]
    %v127 = vld [vmem:[#allocation2 + $0xc8] sm:$0xff]
    %v128 = vld [vmem:[#allocation2 + $0xd0] sm:$0xff]
    %v129 = vld [vmem:[#allocation2 + $0xd8] sm:$0xff]
    %v130 = vld [vmem:[#allocation2 + $0xe0] sm:$0xff]
    %v131 = vld [vmem:[#allocation2 + $0xe8] sm:$0xff]
    %v132 = vld [vmem:[#allocation2 + $0xf0] sm:$0xff]
    %v133 = vld [vmem:[#allocation2 + $0xf8] sm:$0xff]
    %v134 = vld [vmem:[#allocation2 + $0x100] sm:$0xff]
    %v135 = vld [vmem:[#allocation2 + $0x108] sm:$0xff]
    %v136 = vld [vmem:[#allocation2 + $0x110] sm:$0xff]
    %v137 = vld [vmem:[#allocation2 + $0x118] sm:$0xff]
    %v138 = vld [vmem:[#allocation2 + $0x120] sm:$0xff]
    %v139 = vld [vmem:[#allocation2 + $0x128] sm:$0xff]
    %v140 = vld [vmem:[#allocation2 + $0x130] sm:$0xff]
    %v141 = vld [vmem:[#allocation2 + $0x138] sm:$0xff]
    %v142 = vld [vmem:[#allocation2 + $0x140] sm:$0xff]
    %v143 = vld [vmem:[#allocation2 + $0x148] sm:$0xff]
    %v144 = vld [vmem:[#allocation2 + $0x150] sm:$0xff]
    %v145 = vld [vmem:[#allocation2 + $0x158] sm:$0xff]
    %v146 = vld [vmem:[#allocation2 + $0x160] sm:$0xff]
    %v147 = vld [vmem:[#allocation2 + $0x168] sm:$0xff]
    %v148 = vld [vmem:[#allocation2 + $0x170] sm:$0xff]
    %v149 = vld [vmem:[#allocation2 + $0x178] sm:$0xff]
    %v150 = vld [vmem:[#allocation2 + $0x180] sm:$0xff]
    %v151 = vld [vmem:[#allocation2 + $0x188] sm:$0xff]
    %v152 = vld [vmem:[#allocation2 + $0x190] sm:$0xff]
    %v153 = vld [vmem:[#allocation2 + $0x198] sm:$0xff]
    %v154 = vld [vmem:[#allocation2 + $0x1a0] sm:$0xff]
    %v155 = vld [vmem:[#allocation2 + $0x1a8] sm:$0xff]
    %v156 = vld [vmem:[#allocation2 + $0x1b0] sm:$0xff]
    %v157 = vld [vmem:[#allocation2 + $0x1b8] sm:$0xff]
    %v158 = vld [vmem:[#allocation2 + $0x1c0] sm:$0xff]
    %v159 = vld [vmem:[#allocation2 + $0x1c8] sm:$0xff]
    %v160 = vld [vmem:[#allocation2 + $0x1d0] sm:$0xff]
    %v161 = vld [vmem:[#allocation2 + $0x1d8] sm:$0xff]
    %v162 = vld [vmem:[#allocation2 + $0x1e0] sm:$0xff]
    %v163 = vld [vmem:[#allocation2 + $0x1e8] sm:$0xff]
    %v164 = vld [vmem:[#allocation2 + $0x1f0] sm:$0xff]
    %v165 = vld [vmem:[#allocation2 + $0x1f8] sm:$0xff]
    %v166 = vld [vmem:[#allocation2 + $0x200] sm:$0xff]
    %v167 = vld [vmem:[#allocation2 + $0x208] sm:$0xff]
    %v168 = vld [vmem:[#allocation2 + $0x210] sm:$0xff]
    %v169 = vld [vmem:[#allocation2 + $0x218] sm:$0xff]
    %v170 = vld [vmem:[#allocation2 + $0x220] sm:$0xff]
    %v171 = vld [vmem:[#allocation2 + $0x228] sm:$0xff]
    %v172 = vld [vmem:[#allocation2 + $0x230] sm:$0xff]
    %v173 = vld [vmem:[#allocation2 + $0x238] sm:$0xff]
    %v174 = vld [vmem:[#allocation2 + $0x240] sm:$0xff]
    %v175 = vld [vmem:[#allocation2 + $0x248] sm:$0xff]
    %v176 = vld [vmem:[#allocation2 + $0x250] sm:$0xff]
    %v177 = vld [vmem:[#allocation2 + $0x258] sm:$0xff]
    %v178 = vld [vmem:[#allocation2 + $0x260] sm:$0xff]
    %v179 = vld [vmem:[#allocation2 + $0x268] sm:$0xff]
    %v180 = vld [vmem:[#allocation2 + $0x270] sm:$0xff]
    %v181 = vld [vmem:[#allocation2 + $0x278] sm:$0xff]
    %v182 = vld [vmem:[#allocation2 + $0x280] sm:$0xff]
    %v183 = vld [vmem:[#allocation2 + $0x288] sm:$0xff]
    %v184 = vld [vmem:[#allocation2 + $0x290] sm:$0xff]
    %v185 = vld [vmem:[#allocation2 + $0x298] sm:$0xff]
    %v186 = vld [vmem:[#allocation2 + $0x2a0] sm:$0xff]
    %v187 = vld [vmem:[#allocation2 + $0x2a8] sm:$0xff]
    %v188 = vld [vmem:[#allocation2 + $0x2b0] sm:$0xff]
    %v189 = vld [vmem:[#allocation2 + $0x2b8] sm:$0xff]
    %v190 = vld [vmem:[#allocation2 + $0x2c0] sm:$0xff]
    %v191 = vld [vmem:[#allocation2 + $0x2c8] sm:$0xff]
    %v192 = vld [vmem:[#allocation2 + $0x2d0] sm:$0xff]
    %v193 = vld [vmem:[#allocation2 + $0x2d8] sm:$0xff]
    %v194 = vld [vmem:[#allocation2 + $0x2e0] sm:$0xff]
    %v195 = vld [vmem:[#allocation2 + $0x2e8] sm:$0xff]
    %v196 = vld [vmem:[#allocation2 + $0x2f0] sm:$0xff]
    %v197 = vld [vmem:[#allocation2 + $0x2f8] sm:$0xff]
    %v198 = vld [vmem:[#allocation2 + $0x300] sm:$0xff]
    %v199 = vld [vmem:[#allocation2 + $0x308] sm:$0xff]
    %v200 = vld [vmem:[#allocation2 + $0x310] sm:$0xff]
    %v201 = vld [vmem:[#allocation2 + $0x318] sm:$0xff]
    %v202 = vld [vmem:[#allocation2 + $0x320] sm:$0xff]
    %v203 = vld [vmem:[#allocation2 + $0x328] sm:$0xff]
    %v204 = vld [vmem:[#allocation2 + $0x330] sm:$0xff]
    %v205 = vld [vmem:[#allocation2 + $0x338] sm:$0xff]
    %v206 = vld [vmem:[#allocation2 + $0x340] sm:$0xff]
    %v207 = vld [vmem:[#allocation2 + $0x348] sm:$0xff]
    %v208 = vld [vmem:[#allocation2 + $0x350] sm:$0xff]
    %v209 = vld [vmem:[#allocation2 + $0x358] sm:$0xff]
    %v210 = vld [vmem:[#allocation2 + $0x360] sm:$0xff]
    %v211 = vld [vmem:[#allocation2 + $0x368] sm:$0xff]
    %v212 = vld [vmem:[#allocation2 + $0x370] sm:$0xff]
    %v213 = vld [vmem:[#allocation2 + $0x378] sm:$0xff]
    %v214 = vld [vmem:[#allocation2 + $0x380] sm:$0xff]
    %v215 = vld [vmem:[#allocation2 + $0x388] sm:$0xff]
    %v216 = vld [vmem:[#allocation2 + $0x390] sm:$0xff]
    %v217 = vld [vmem:[#allocation2 + $0x398] sm:$0xff]
    %v218 = vld [vmem:[#allocation2 + $0x3a0] sm:$0xff]
    %v219 = vld [vmem:[#allocation2 + $0x3a8] sm:$0xff]
    %v220 = vld [vmem:[#allocation2 + $0x3b0] sm:$0xff]
    %v221 = vld [vmem:[#allocation2 + $0x3b8] sm:$0xff]
    %v222 = vld [vmem:[#allocation2 + $0x3c0] sm:$0xff]
    %v223 = vld [vmem:[#allocation2 + $0x3c8] sm:$0xff]
    %v224 = vld [vmem:[#allocation2 + $0x3d0] sm:$0xff]
    %v225 = vld [vmem:[#allocation2 + $0x3d8] sm:$0xff]
    %v226 = vld [vmem:[#allocation2 + $0x3e0] sm:$0xff]
    %v227 = vld [vmem:[#allocation2 + $0x3e8] sm:$0xff]
    %v228 = vld [vmem:[#allocation2 + $0x3f0] sm:$0xff]
    %v229 = vld [vmem:[#allocation2 + $0x3f8] sm:$0xff]
    %v358 = vunpack.c.l.b16 %v102
    %v359 = vunpack.c.h.b16 %v102
    %v360 = vunpack.c.l.b16 %v103
    %v361 = vunpack.c.h.b16 %v103
    %v362 = vunpack.c.l.b16 %v104
    %v363 = vunpack.c.h.b16 %v104
    %v364 = vunpack.c.l.b16 %v105
    %v365 = vunpack.c.h.b16 %v105
    %v366 = vunpack.c.l.b16 %v106
    %v367 = vunpack.c.h.b16 %v106
    %v368 = vunpack.c.l.b16 %v107
    %v369 = vunpack.c.h.b16 %v107
    %v370 = vunpack.c.l.b16 %v108
    %v371 = vunpack.c.h.b16 %v108
    %v372 = vunpack.c.l.b16 %v109
    %v373 = vunpack.c.h.b16 %v109
    %v374 = vunpack.c.l.b16 %v110
    %v375 = vunpack.c.h.b16 %v110
    %v376 = vunpack.c.l.b16 %v111
    %v377 = vunpack.c.h.b16 %v111
    %v378 = vunpack.c.l.b16 %v112
    %v379 = vunpack.c.h.b16 %v112
    %v380 = vunpack.c.l.b16 %v113
    %v381 = vunpack.c.h.b16 %v113
    %v382 = vunpack.c.l.b16 %v114
    %v383 = vunpack.c.h.b16 %v114
    %v384 = vunpack.c.l.b16 %v115
    %v385 = vunpack.c.h.b16 %v115
    %v386 = vunpack.c.l.b16 %v116
    %v387 = vunpack.c.h.b16 %v116
    %v388 = vunpack.c.l.b16 %v117
    %v389 = vunpack.c.h.b16 %v117
    %v390 = vunpack.c.l.b16 %v118
    %v391 = vunpack.c.h.b16 %v118
    %v392 = vunpack.c.l.b16 %v119
    %v393 = vunpack.c.h.b16 %v119
    %v394 = vunpack.c.l.b16 %v120
    %v395 = vunpack.c.h.b16 %v120
    %v396 = vunpack.c.l.b16 %v121
    %v397 = vunpack.c.h.b16 %v121
    %v398 = vunpack.c.l.b16 %v122
    %v399 = vunpack.c.h.b16 %v122
    %v400 = vunpack.c.l.b16 %v123
    %v401 = vunpack.c.h.b16 %v123
    %v402 = vunpack.c.l.b16 %v124
    %v403 = vunpack.c.h.b16 %v124
    %v404 = vunpack.c.l.b16 %v125
    %v405 = vunpack.c.h.b16 %v125
    %v406 = vunpack.c.l.b16 %v126
    %v407 = vunpack.c.h.b16 %v126
    %v408 = vunpack.c.l.b16 %v127
    %v409 = vunpack.c.h.b16 %v127
    %v410 = vunpack.c.l.b16 %v128
    %v411 = vunpack.c.h.b16 %v128
    %v412 = vunpack.c.l.b16 %v129
    %v413 = vunpack.c.h.b16 %v129
    %v414 = vunpack.c.l.b16 %v130
    %v415 = vunpack.c.h.b16 %v130
    %v416 = vunpack.c.l.b16 %v131
    %v417 = vunpack.c.h.b16 %v131
    %v418 = vunpack.c.l.b16 %v132
    %v419 = vunpack.c.h.b16 %v132
    %v420 = vunpack.c.l.b16 %v133
    %v421 = vunpack.c.h.b16 %v133
    %v422 = vunpack.c.l.b16 %v134
    %v423 = vunpack.c.h.b16 %v134
    %v424 = vunpack.c.l.b16 %v135
    %v425 = vunpack.c.h.b16 %v135
    %v426 = vunpack.c.l.b16 %v136
    %v427 = vunpack.c.h.b16 %v136
    %v428 = vunpack.c.l.b16 %v137
    %v429 = vunpack.c.h.b16 %v137
    %v430 = vunpack.c.l.b16 %v138
    %v431 = vunpack.c.h.b16 %v138
    %v432 = vunpack.c.l.b16 %v139
    %v433 = vunpack.c.h.b16 %v139
    %v434 = vunpack.c.l.b16 %v140
    %v435 = vunpack.c.h.b16 %v140
    %v436 = vunpack.c.l.b16 %v141
    %v437 = vunpack.c.h.b16 %v141
    %v438 = vunpack.c.l.b16 %v142
    %v439 = vunpack.c.h.b16 %v142
    %v440 = vunpack.c.l.b16 %v143
    %v441 = vunpack.c.h.b16 %v143
    %v442 = vunpack.c.l.b16 %v144
    %v443 = vunpack.c.h.b16 %v144
    %v444 = vunpack.c.l.b16 %v145
    %v445 = vunpack.c.h.b16 %v145
    %v446 = vunpack.c.l.b16 %v146
    %v447 = vunpack.c.h.b16 %v146
    %v448 = vunpack.c.l.b16 %v147
    %v449 = vunpack.c.h.b16 %v147
    %v450 = vunpack.c.l.b16 %v148
    %v451 = vunpack.c.h.b16 %v148
    %v452 = vunpack.c.l.b16 %v149
    %v453 = vunpack.c.h.b16 %v149
    %v454 = vunpack.c.l.b16 %v150
    %v455 = vunpack.c.h.b16 %v150
    %v456 = vunpack.c.l.b16 %v151
    %v457 = vunpack.c.h.b16 %v151
    %v458 = vunpack.c.l.b16 %v152
    %v459 = vunpack.c.h.b16 %v152
    %v460 = vunpack.c.l.b16 %v153
    %v461 = vunpack.c.h.b16 %v153
    %v462 = vunpack.c.l.b16 %v154
    %v463 = vunpack.c.h.b16 %v154
    %v464 = vunpack.c.l.b16 %v155
    %v465 = vunpack.c.h.b16 %v155
    %v466 = vunpack.c.l.b16 %v156
    %v467 = vunpack.c.h.b16 %v156
    %v468 = vunpack.c.l.b16 %v157
    %v469 = vunpack.c.h.b16 %v157
    %v470 = vunpack.c.l.b16 %v158
    %v471 = vunpack.c.h.b16 %v158
    %v472 = vunpack.c.l.b16 %v159
    %v473 = vunpack.c.h.b16 %v159
    %v474 = vunpack.c.l.b16 %v160
    %v475 = vunpack.c.h.b16 %v160
    %v476 = vunpack.c.l.b16 %v161
    %v477 = vunpack.c.h.b16 %v161
    %v478 = vunpack.c.l.b16 %v162
    %v479 = vunpack.c.h.b16 %v162
    %v480 = vunpack.c.l.b16 %v163
    %v481 = vunpack.c.h.b16 %v163
    %v482 = vunpack.c.l.b16 %v164
    %v483 = vunpack.c.h.b16 %v164
    %v484 = vunpack.c.l.b16 %v165
    %v485 = vunpack.c.h.b16 %v165
    %v486 = vunpack.c.l.b16 %v166
    %v487 = vunpack.c.h.b16 %v166
    %v488 = vunpack.c.l.b16 %v167
    %v489 = vunpack.c.h.b16 %v167
    %v490 = vunpack.c.l.b16 %v168
    %v491 = vunpack.c.h.b16 %v168
    %v492 = vunpack.c.l.b16 %v169
    %v493 = vunpack.c.h.b16 %v169
    %v494 = vunpack.c.l.b16 %v170
    %v495 = vunpack.c.h.b16 %v170
    %v496 = vunpack.c.l.b16 %v171
    %v497 = vunpack.c.h.b16 %v171
    %v498 = vunpack.c.l.b16 %v172
    %v499 = vunpack.c.h.b16 %v172
    %v500 = vunpack.c.l.b16 %v173
    %v501 = vunpack.c.h.b16 %v173
    %v502 = vunpack.c.l.b16 %v174
    %v503 = vunpack.c.h.b16 %v174
    %v504 = vunpack.c.l.b16 %v175
    %v505 = vunpack.c.h.b16 %v175
    %v506 = vunpack.c.l.b16 %v176
    %v507 = vunpack.c.h.b16 %v176
    %v508 = vunpack.c.l.b16 %v177
    %v509 = vunpack.c.h.b16 %v177
    %v510 = vunpack.c.l.b16 %v178
    %v511 = vunpack.c.h.b16 %v178
    %v512 = vunpack.c.l.b16 %v179
    %v513 = vunpack.c.h.b16 %v179
    %v514 = vunpack.c.l.b16 %v180
    %v515 = vunpack.c.h.b16 %v180
    %v516 = vunpack.c.l.b16 %v181
    %v517 = vunpack.c.h.b16 %v181
    %v518 = vunpack.c.l.b16 %v182
    %v519 = vunpack.c.h.b16 %v182
    %v520 = vunpack.c.l.b16 %v183
    %v521 = vunpack.c.h.b16 %v183
    %v522 = vunpack.c.l.b16 %v184
    %v523 = vunpack.c.h.b16 %v184
    %v524 = vunpack.c.l.b16 %v185
    %v525 = vunpack.c.h.b16 %v185
    %v526 = vunpack.c.l.b16 %v186
    %v527 = vunpack.c.h.b16 %v186
    %v528 = vunpack.c.l.b16 %v187
    %v529 = vunpack.c.h.b16 %v187
    %v530 = vunpack.c.l.b16 %v188
    %v531 = vunpack.c.h.b16 %v188
    %v532 = vunpack.c.l.b16 %v189
    %v533 = vunpack.c.h.b16 %v189
    %v534 = vunpack.c.l.b16 %v190
    %v535 = vunpack.c.h.b16 %v190
    %v536 = vunpack.c.l.b16 %v191
    %v537 = vunpack.c.h.b16 %v191
    %v538 = vunpack.c.l.b16 %v192
    %v539 = vunpack.c.h.b16 %v192
    %v540 = vunpack.c.l.b16 %v193
    %v541 = vunpack.c.h.b16 %v193
    %v542 = vunpack.c.l.b16 %v194
    %v543 = vunpack.c.h.b16 %v194
    %v544 = vunpack.c.l.b16 %v195
    %v545 = vunpack.c.h.b16 %v195
    %v546 = vunpack.c.l.b16 %v196
    %v547 = vunpack.c.h.b16 %v196
    %v548 = vunpack.c.l.b16 %v197
    %v549 = vunpack.c.h.b16 %v197
    %v550 = vunpack.c.l.b16 %v198
    %v551 = vunpack.c.h.b16 %v198
    %v552 = vunpack.c.l.b16 %v199
    %v553 = vunpack.c.h.b16 %v199
    %v554 = vunpack.c.l.b16 %v200
    %v555 = vunpack.c.h.b16 %v200
    %v556 = vunpack.c.l.b16 %v201
    %v557 = vunpack.c.h.b16 %v201
    %v558 = vunpack.c.l.b16 %v202
    %v559 = vunpack.c.h.b16 %v202
    %v560 = vunpack.c.l.b16 %v203
    %v561 = vunpack.c.h.b16 %v203
    %v562 = vunpack.c.l.b16 %v204
    %v563 = vunpack.c.h.b16 %v204
    %v564 = vunpack.c.l.b16 %v205
    %v565 = vunpack.c.h.b16 %v205
    %v566 = vunpack.c.l.b16 %v206
    %v567 = vunpack.c.h.b16 %v206
    %v568 = vunpack.c.l.b16 %v207
    %v569 = vunpack.c.h.b16 %v207
    %v570 = vunpack.c.l.b16 %v208
    %v571 = vunpack.c.h.b16 %v208
    %v572 = vunpack.c.l.b16 %v209
    %v573 = vunpack.c.h.b16 %v209
    %v574 = vunpack.c.l.b16 %v210
    %v575 = vunpack.c.h.b16 %v210
    %v576 = vunpack.c.l.b16 %v211
    %v577 = vunpack.c.h.b16 %v211
    %v578 = vunpack.c.l.b16 %v212
    %v579 = vunpack.c.h.b16 %v212
    %v580 = vunpack.c.l.b16 %v213
    %v581 = vunpack.c.h.b16 %v213
    %v582 = vunpack.c.l.b16 %v214
    %v583 = vunpack.c.h.b16 %v214
    %v584 = vunpack.c.l.b16 %v215
    %v585 = vunpack.c.h.b16 %v215
    %v586 = vunpack.c.l.b16 %v216
    %v587 = vunpack.c.h.b16 %v216
    %v588 = vunpack.c.l.b16 %v217
    %v589 = vunpack.c.h.b16 %v217
    %v590 = vunpack.c.l.b16 %v218
    %v591 = vunpack.c.h.b16 %v218
    %v592 = vunpack.c.l.b16 %v219
    %v593 = vunpack.c.h.b16 %v219
    %v594 = vunpack.c.l.b16 %v220
    %v595 = vunpack.c.h.b16 %v220
    %v596 = vunpack.c.l.b16 %v221
    %v597 = vunpack.c.h.b16 %v221
    %v598 = vunpack.c.l.b16 %v222
    %v599 = vunpack.c.h.b16 %v222
    %v600 = vunpack.c.l.b16 %v223
    %v601 = vunpack.c.h.b16 %v223
    %v602 = vunpack.c.l.b16 %v224
    %v603 = vunpack.c.h.b16 %v224
    %v604 = vunpack.c.l.b16 %v225
    %v605 = vunpack.c.h.b16 %v225
    %v606 = vunpack.c.l.b16 %v226
    %v607 = vunpack.c.h.b16 %v226
    %v608 = vunpack.c.l.b16 %v227
    %v609 = vunpack.c.h.b16 %v227
    %v610 = vunpack.c.l.b16 %v228
    %v611 = vunpack.c.h.b16 %v228
    %v612 = vunpack.c.l.b16 %v229
    %v613 = vunpack.c.h.b16 %v229
    %v614 = vpack.c.b16 %v366, %v358
    %v615 = vpack.c.b16 %v367, %v359
    %v616 = vpack.c.b16 %v368, %v360
    %v617 = vpack.c.b16 %v369, %v361
    %v618 = vpack.c.b16 %v370, %v362
    %v619 = vpack.c.b16 %v371, %v363
    %v620 = vpack.c.b16 %v372, %v364
    %v621 = vpack.c.b16 %v373, %v365
    %v622 = vpack.c.b16 %v382, %v374
    %v623 = vpack.c.b16 %v383, %v375
    %v624 = vpack.c.b16 %v384, %v376
    %v625 = vpack.c.b16 %v385, %v377
    %v626 = vpack.c.b16 %v386, %v378
    %v627 = vpack.c.b16 %v387, %v379
    %v628 = vpack.c.b16 %v388, %v380
    %v629 = vpack.c.b16 %v389, %v381
    %v630 = vpack.c.b16 %v398, %v390
    %v631 = vpack.c.b16 %v399, %v391
    %v632 = vpack.c.b16 %v400, %v392
    %v633 = vpack.c.b16 %v401, %v393
    %v634 = vpack.c.b16 %v402, %v394
    %v635 = vpack.c.b16 %v403, %v395
    %v636 = vpack.c.b16 %v404, %v396
    %v637 = vpack.c.b16 %v405, %v397
    %v638 = vpack.c.b16 %v414, %v406
    %v639 = vpack.c.b16 %v415, %v407
    %v640 = vpack.c.b16 %v416, %v408
    %v641 = vpack.c.b16 %v417, %v409
    %v642 = vpack.c.b16 %v418, %v410
    %v643 = vpack.c.b16 %v419, %v411
    %v644 = vpack.c.b16 %v420, %v412
    %v645 = vpack.c.b16 %v421, %v413
    %v646 = vpack.c.b16 %v430, %v422
    %v647 = vpack.c.b16 %v431, %v423
    %v648 = vpack.c.b16 %v432, %v424
    %v649 = vpack.c.b16 %v433, %v425
    %v650 = vpack.c.b16 %v434, %v426
    %v651 = vpack.c.b16 %v435, %v427
    %v652 = vpack.c.b16 %v436, %v428
    %v653 = vpack.c.b16 %v437, %v429
    %v654 = vpack.c.b16 %v446, %v438
    %v655 = vpack.c.b16 %v447, %v439
    %v656 = vpack.c.b16 %v448, %v440
    %v657 = vpack.c.b16 %v449, %v441
    %v658 = vpack.c.b16 %v450, %v442
    %v659 = vpack.c.b16 %v451, %v443
    %v660 = vpack.c.b16 %v452, %v444
    %v661 = vpack.c.b16 %v453, %v445
    %v662 = vpack.c.b16 %v462, %v454
    %v663 = vpack.c.b16 %v463, %v455
    %v664 = vpack.c.b16 %v464, %v456
    %v665 = vpack.c.b16 %v465, %v457
    %v666 = vpack.c.b16 %v466, %v458
    %v667 = vpack.c.b16 %v467, %v459
    %v668 = vpack.c.b16 %v468, %v460
    %v669 = vpack.c.b16 %v469, %v461
    %v670 = vpack.c.b16 %v478, %v470
    %v671 = vpack.c.b16 %v479, %v471
    %v672 = vpack.c.b16 %v480, %v472
    %v673 = vpack.c.b16 %v481, %v473
    %v674 = vpack.c.b16 %v482, %v474
    %v675 = vpack.c.b16 %v483, %v475
    %v676 = vpack.c.b16 %v484, %v476
    %v677 = vpack.c.b16 %v485, %v477
    %v678 = vpack.c.b16 %v494, %v486
    %v679 = vpack.c.b16 %v495, %v487
    %v680 = vpack.c.b16 %v496, %v488
    %v681 = vpack.c.b16 %v497, %v489
    %v682 = vpack.c.b16 %v498, %v490
    %v683 = vpack.c.b16 %v499, %v491
    %v684 = vpack.c.b16 %v500, %v492
    %v685 = vpack.c.b16 %v501, %v493
    %v686 = vpack.c.b16 %v510, %v502
    %v687 = vpack.c.b16 %v511, %v503
    %v688 = vpack.c.b16 %v512, %v504
    %v689 = vpack.c.b16 %v513, %v505
    %v690 = vpack.c.b16 %v514, %v506
    %v691 = vpack.c.b16 %v515, %v507
    %v692 = vpack.c.b16 %v516, %v508
    %v693 = vpack.c.b16 %v517, %v509
    %v694 = vpack.c.b16 %v526, %v518
    %v695 = vpack.c.b16 %v527, %v519
    %v696 = vpack.c.b16 %v528, %v520
    %v697 = vpack.c.b16 %v529, %v521
    %v698 = vpack.c.b16 %v530, %v522
    %v699 = vpack.c.b16 %v531, %v523
    %v700 = vpack.c.b16 %v532, %v524
    %v701 = vpack.c.b16 %v533, %v525
    %v702 = vpack.c.b16 %v542, %v534
    %v703 = vpack.c.b16 %v543, %v535
    %v704 = vpack.c.b16 %v544, %v536
    %v705 = vpack.c.b16 %v545, %v537
    %v706 = vpack.c.b16 %v546, %v538
    %v707 = vpack.c.b16 %v547, %v539
    %v708 = vpack.c.b16 %v548, %v540
    %v709 = vpack.c.b16 %v549, %v541
    %v710 = vpack.c.b16 %v558, %v550
    %v711 = vpack.c.b16 %v559, %v551
    %v712 = vpack.c.b16 %v560, %v552
    %v713 = vpack.c.b16 %v561, %v553
    %v714 = vpack.c.b16 %v562, %v554
    %v715 = vpack.c.b16 %v563, %v555
    %v716 = vpack.c.b16 %v564, %v556
    %v717 = vpack.c.b16 %v565, %v557
    %v718 = vpack.c.b16 %v574, %v566
    %v719 = vpack.c.b16 %v575, %v567
    %v720 = vpack.c.b16 %v576, %v568
    %v721 = vpack.c.b16 %v577, %v569
    %v722 = vpack.c.b16 %v578, %v570
    %v723 = vpack.c.b16 %v579, %v571
    %v724 = vpack.c.b16 %v580, %v572
    %v725 = vpack.c.b16 %v581, %v573
    %v726 = vpack.c.b16 %v590, %v582
    %v727 = vpack.c.b16 %v591, %v583
    %v728 = vpack.c.b16 %v592, %v584
    %v729 = vpack.c.b16 %v593, %v585
    %v730 = vpack.c.b16 %v594, %v586
    %v731 = vpack.c.b16 %v595, %v587
    %v732 = vpack.c.b16 %v596, %v588
    %v733 = vpack.c.b16 %v597, %v589
    %v734 = vpack.c.b16 %v606, %v598
    %v735 = vpack.c.b16 %v607, %v599
    %v736 = vpack.c.b16 %v608, %v600
    %v737 = vpack.c.b16 %v609, %v601
    %v738 = vpack.c.b16 %v610, %v602
    %v739 = vpack.c.b16 %v611, %v603
    %v740 = vpack.c.b16 %v612, %v604
    %v741 = vpack.c.b16 %v613, %v605
    %870 = vmatprep.subr.bf16.mxu0 %v671
    %871 = vmatpush1.bf16.msra.mxu0 %v670
    %872 = vmatprep.subr.bf16.mxu0 %v663
    %873 = vmatpush1.bf16.msra.mxu0 %v662
    %874 = vmatprep.subr.bf16.mxu0 %v655
    %875 = vmatpush1.bf16.msra.mxu0 %v654
    %876 = vmatprep.subr.bf16.mxu0 %v647
    %877 = vmatpush1.bf16.msra.mxu0 %v646
    %878 = vmatprep.subr.bf16.mxu0 %v639
    %879 = vmatpush1.bf16.msra.mxu0 %v638
    %880 = vmatprep.subr.bf16.mxu0 %v631
    %881 = vmatpush1.bf16.msra.mxu0 %v630
    %882 = vmatprep.subr.bf16.mxu0 %v623
    %883 = vmatpush1.bf16.msra.mxu0 %v622
    %884 = vmatprep.subr.bf16.mxu0 %v615
    %885 = vmatpush1.bf16.msra.mxu0 %v614
    %886 = vmatprep.subr.bf16.mxu0 %v735
    %887 = vmatpush2.bf16.msra.mxu0 %v734
    %888 = vmatprep.subr.bf16.mxu0 %v727
    %889 = vmatpush2.bf16.msra.mxu0 %v726
    %890 = vmatprep.subr.bf16.mxu0 %v719
    %891 = vmatpush2.bf16.msra.mxu0 %v718
    %892 = vmatprep.subr.bf16.mxu0 %v711
    %893 = vmatpush2.bf16.msra.mxu0 %v710
    %894 = vmatprep.subr.bf16.mxu0 %v703
    %895 = vmatpush2.bf16.msra.mxu0 %v702
    %896 = vmatprep.subr.bf16.mxu0 %v695
    %897 = vmatpush2.bf16.msra.mxu0 %v694
    %898 = vmatprep.subr.bf16.mxu0 %v687
    %899 = vmatpush2.bf16.msra.mxu0 %v686
    %900 = vmatprep.subr.bf16.mxu0 %v679
    %901 = vmatpush2.bf16.msra.mxu0 %v678
    %902 = vmatprep.mubr.bf16.mxu0 %v101
    %903 = vmatmul.mubr.bf16.gmra.mxu0 %v100
    %v904 = vpop.f32.mrf.mxu0
    %v905 = vadd.f32 0.0, %v904
    %v906 = vpop.f32.mrf.mxu0
    %v907 = vadd.f32 0.0, %v906
    %v908 = vpop.f32.mrf.mxu0
    %v909 = vpop.f32.mrf.mxu0
    %910 = vdwg.mxu0
    %911 = vmatprep.subr.bf16.mxu0 %v673
    %912 = vmatpush1.bf16.msra.mxu0 %v672
    %913 = vmatprep.subr.bf16.mxu0 %v665
    %914 = vmatpush1.bf16.msra.mxu0 %v664
    %915 = vmatprep.subr.bf16.mxu0 %v657
    %916 = vmatpush1.bf16.msra.mxu0 %v656
    %917 = vmatprep.subr.bf16.mxu0 %v649
    %918 = vmatpush1.bf16.msra.mxu0 %v648
    %919 = vmatprep.subr.bf16.mxu0 %v641
    %920 = vmatpush1.bf16.msra.mxu0 %v640
    %921 = vmatprep.subr.bf16.mxu0 %v633
    %922 = vmatpush1.bf16.msra.mxu0 %v632
    %923 = vmatprep.subr.bf16.mxu0 %v625
    %924 = vmatpush1.bf16.msra.mxu0 %v624
    %925 = vmatprep.subr.bf16.mxu0 %v617
    %926 = vmatpush1.bf16.msra.mxu0 %v616
    %927 = vmatprep.subr.bf16.mxu0 %v737
    %928 = vmatpush2.bf16.msra.mxu0 %v736
    %929 = vmatprep.subr.bf16.mxu0 %v729
    %930 = vmatpush2.bf16.msra.mxu0 %v728
    %931 = vmatprep.subr.bf16.mxu0 %v721
    %932 = vmatpush2.bf16.msra.mxu0 %v720
    %933 = vmatprep.subr.bf16.mxu0 %v713
    %934 = vmatpush2.bf16.msra.mxu0 %v712
    %935 = vmatprep.subr.bf16.mxu0 %v705
    %936 = vmatpush2.bf16.msra.mxu0 %v704
    %937 = vmatprep.subr.bf16.mxu0 %v697
    %938 = vmatpush2.bf16.msra.mxu0 %v696
    %939 = vmatprep.subr.bf16.mxu0 %v689
    %940 = vmatpush2.bf16.msra.mxu0 %v688
    %941 = vmatprep.subr.bf16.mxu0 %v681
    %942 = vmatpush2.bf16.msra.mxu0 %v680
    %943 = vmatprep.mubr.bf16.mxu0 %v101
    %944 = vmatmul.mubr.bf16.gmra.mxu0 %v100
    %v945 = vpop.f32.mrf.mxu0
    %v946 = vadd.f32 0.0, %v945
    %v947 = vpop.f32.mrf.mxu0
    %v948 = vadd.f32 0.0, %v947
    %v949 = vpop.f32.mrf.mxu0
    %v950 = vpop.f32.mrf.mxu0
    %951 = vdwg.mxu0
    %952 = vmatprep.subr.bf16.mxu0 %v675
    %953 = vmatpush1.bf16.msra.mxu0 %v674
    %954 = vmatprep.subr.bf16.mxu0 %v667
    %955 = vmatpush1.bf16.msra.mxu0 %v666
    %956 = vmatprep.subr.bf16.mxu0 %v659
    %957 = vmatpush1.bf16.msra.mxu0 %v658
    %958 = vmatprep.subr.bf16.mxu0 %v651
    %959 = vmatpush1.bf16.msra.mxu0 %v650
    %960 = vmatprep.subr.bf16.mxu0 %v643
    %961 = vmatpush1.bf16.msra.mxu0 %v642
    %962 = vmatprep.subr.bf16.mxu0 %v635
    %963 = vmatpush1.bf16.msra.mxu0 %v634
    %964 = vmatprep.subr.bf16.mxu0 %v627
    %965 = vmatpush1.bf16.msra.mxu0 %v626
    %966 = vmatprep.subr.bf16.mxu0 %v619
    %967 = vmatpush1.bf16.msra.mxu0 %v618
    %968 = vmatprep.subr.bf16.mxu0 %v739
    %969 = vmatpush2.bf16.msra.mxu0 %v738
    %970 = vmatprep.subr.bf16.mxu0 %v731
    %971 = vmatpush2.bf16.msra.mxu0 %v730
    %972 = vmatprep.subr.bf16.mxu0 %v723
    %973 = vmatpush2.bf16.msra.mxu0 %v722
    %974 = vmatprep.subr.bf16.mxu0 %v715
    %975 = vmatpush2.bf16.msra.mxu0 %v714
    %976 = vmatprep.subr.bf16.mxu0 %v707
    %977 = vmatpush2.bf16.msra.mxu0 %v706
    %978 = vmatprep.subr.bf16.mxu0 %v699
    %979 = vmatpush2.bf16.msra.mxu0 %v698
    %980 = vmatprep.subr.bf16.mxu0 %v691
    %981 = vmatpush2.bf16.msra.mxu0 %v690
    %982 = vmatprep.subr.bf16.mxu0 %v683
    %983 = vmatpush2.bf16.msra.mxu0 %v682
    %984 = vmatprep.mubr.bf16.mxu0 %v101
    %985 = vmatmul.mubr.bf16.gmra.mxu0 %v100
    %v986 = vpop.f32.mrf.mxu0
    %v987 = vadd.f32 0.0, %v986
    %v988 = vpop.f32.mrf.mxu0
    %v989 = vadd.f32 0.0, %v988
    %v990 = vpop.f32.mrf.mxu0
    %v991 = vpop.f32.mrf.mxu0
    %992 = vdwg.mxu0
    %993 = vmatprep.subr.bf16.mxu0 %v677
    %994 = vmatpush1.bf16.msra.mxu0 %v676
    %995 = vmatprep.subr.bf16.mxu0 %v669
    %996 = vmatpush1.bf16.msra.mxu0 %v668
    %997 = vmatprep.subr.bf16.mxu0 %v661
    %998 = vmatpush1.bf16.msra.mxu0 %v660
    %999 = vmatprep.subr.bf16.mxu0 %v653
    %1000 = vmatpush1.bf16.msra.mxu0 %v652
    %1001 = vmatprep.subr.bf16.mxu0 %v645
    %1002 = vmatpush1.bf16.msra.mxu0 %v644
    %1003 = vmatprep.subr.bf16.mxu0 %v637
    %1004 = vmatpush1.bf16.msra.mxu0 %v636
    %1005 = vmatprep.subr.bf16.mxu0 %v629
    %1006 = vmatpush1.bf16.msra.mxu0 %v628
    %1007 = vmatprep.subr.bf16.mxu0 %v621
    %1008 = vmatpush1.bf16.msra.mxu0 %v620
    %1009 = vmatprep.subr.bf16.mxu0 %v741
    %1010 = vmatpush2.bf16.msra.mxu0 %v740
    %1011 = vmatprep.subr.bf16.mxu0 %v733
    %1012 = vmatpush2.bf16.msra.mxu0 %v732
    %1013 = vmatprep.subr.bf16.mxu0 %v725
    %1014 = vmatpush2.bf16.msra.mxu0 %v724
    %1015 = vmatprep.subr.bf16.mxu0 %v717
    %1016 = vmatpush2.bf16.msra.mxu0 %v716
    %1017 = vmatprep.subr.bf16.mxu0 %v709
    %1018 = vmatpush2.bf16.msra.mxu0 %v708
    %1019 = vmatprep.subr.bf16.mxu0 %v701
    %1020 = vmatpush2.bf16.msra.mxu0 %v700
    %1021 = vmatprep.subr.bf16.mxu0 %v693
    %1022 = vmatpush2.bf16.msra.mxu0 %v692
    %1023 = vmatprep.subr.bf16.mxu0 %v685
    %1024 = vmatpush2.bf16.msra.mxu0 %v684
    %1025 = vmatprep.mubr.bf16.mxu0 %v101
    %1026 = vmatmul.mubr.bf16.gmra.mxu0 %v100
    %v1027 = vpop.f32.mrf.mxu0
    %v1028 = vadd.f32 0.0, %v1027
    %v1029 = vpop.f32.mrf.mxu0
    %v1030 = vadd.f32 0.0, %v1029
    %v1031 = vpop.f32.mrf.mxu0
    %v1032 = vpop.f32.mrf.mxu0
    %1033 = vdwg.mxu0
    %v1034 = vmax.f32 %v905, %v946
    %v1035 = vmax.f32 %v907, %v948
    %v1036 = vmax.f32 %v1034, %v987
    %v1037 = vmax.f32 %v1035, %v989
    %v1038 = vmax.f32 %v1036, %v1028
    %v1039 = vmax.f32 %v1037, %v1030
    %v1040 = vld [vmem:[%s2] sm:$0x3]
    %v1042 = vlaneseq
    %v1043 = vshrl.u32 %v1042, 7
    %v1044 = vsub.s32 0, %v1043
    %v1045 = vrot.slane %v1040, %v1044
    %v1046 = vlaneseq
    %v1047 = vshrl.u32 %v1046, 7
    %v1048 = vsub.s32 1, %v1047
    %v1049 = vrot.slane %v1040, %v1048
    %v1052 = vadd.f32 %v1038, %v1045
    %v1053 = vadd.f32 %v1039, %v1049
    %v1054 = vmax.f32 %v1052, 0.0
    %v1055 = vmax.f32 %v1053, 0.0
    %v1056 = vpack.c.bf16 %v1054, %v1054
    %v1057 = vpack.c.bf16 %v1055, %v1055
    %v1058 = vld [vmem:[#allocation4] sm:$0xff]
    %v1059 = vld [vmem:[#allocation4 + $0x8] sm:$0xff]
    %v1060 = vld [vmem:[#allocation4 + $0x10] sm:$0xff]
    %v1061 = vld [vmem:[#allocation4 + $0x18] sm:$0xff]
    %v1062 = vld [vmem:[#allocation4 + $0x20] sm:$0xff]
    %v1063 = vld [vmem:[#allocation4 + $0x28] sm:$0xff]
    %v1064 = vld [vmem:[#allocation4 + $0x30] sm:$0xff]
    %v1065 = vld [vmem:[#allocation4 + $0x38] sm:$0xff]
    %v1066 = vld [vmem:[#allocation4 + $0x40] sm:$0xff]
    %v1067 = vld [vmem:[#allocation4 + $0x48] sm:$0xff]
    %v1068 = vld [vmem:[#allocation4 + $0x50] sm:$0xff]
    %v1069 = vld [vmem:[#allocation4 + $0x58] sm:$0xff]
    %v1070 = vld [vmem:[#allocation4 + $0x60] sm:$0xff]
    %v1071 = vld [vmem:[#allocation4 + $0x68] sm:$0xff]
    %v1072 = vld [vmem:[#allocation4 + $0x70] sm:$0xff]
    %v1073 = vld [vmem:[#allocation4 + $0x78] sm:$0xff]
    %v1074 = vld [vmem:[#allocation4 + $0x80] sm:$0xff]
    %v1075 = vld [vmem:[#allocation4 + $0x88] sm:$0xff]
    %v1076 = vld [vmem:[#allocation4 + $0x90] sm:$0xff]
    %v1077 = vld [vmem:[#allocation4 + $0x98] sm:$0xff]
    %v1078 = vld [vmem:[#allocation4 + $0xa0] sm:$0xff]
    %v1079 = vld [vmem:[#allocation4 + $0xa8] sm:$0xff]
    %v1080 = vld [vmem:[#allocation4 + $0xb0] sm:$0xff]
    %v1081 = vld [vmem:[#allocation4 + $0xb8] sm:$0xff]
    %v1082 = vld [vmem:[#allocation4 + $0xc0] sm:$0xff]
    %v1083 = vld [vmem:[#allocation4 + $0xc8] sm:$0xff]
    %v1084 = vld [vmem:[#allocation4 + $0xd0] sm:$0xff]
    %v1085 = vld [vmem:[#allocation4 + $0xd8] sm:$0xff]
    %v1086 = vld [vmem:[#allocation4 + $0xe0] sm:$0xff]
    %v1087 = vld [vmem:[#allocation4 + $0xe8] sm:$0xff]
    %v1088 = vld [vmem:[#allocation4 + $0xf0] sm:$0xff]
    %v1089 = vld [vmem:[#allocation4 + $0xf8] sm:$0xff]
    %v1090 = vld [vmem:[#allocation4 + $0x100] sm:$0xff]
    %v1091 = vld [vmem:[#allocation4 + $0x108] sm:$0xff]
    %v1092 = vld [vmem:[#allocation4 + $0x110] sm:$0xff]
    %v1093 = vld [vmem:[#allocation4 + $0x118] sm:$0xff]
    %v1094 = vld [vmem:[#allocation4 + $0x120] sm:$0xff]
    %v1095 = vld [vmem:[#allocation4 + $0x128] sm:$0xff]
    %v1096 = vld [vmem:[#allocation4 + $0x130] sm:$0xff]
    %v1097 = vld [vmem:[#allocation4 + $0x138] sm:$0xff]
    %v1098 = vld [vmem:[#allocation4 + $0x140] sm:$0xff]
    %v1099 = vld [vmem:[#allocation4 + $0x148] sm:$0xff]
    %v1100 = vld [vmem:[#allocation4 + $0x150] sm:$0xff]
    %v1101 = vld [vmem:[#allocation4 + $0x158] sm:$0xff]
    %v1102 = vld [vmem:[#allocation4 + $0x160] sm:$0xff]
    %v1103 = vld [vmem:[#allocation4 + $0x168] sm:$0xff]
    %v1104 = vld [vmem:[#allocation4 + $0x170] sm:$0xff]
    %v1105 = vld [vmem:[#allocation4 + $0x178] sm:$0xff]
    %v1106 = vld [vmem:[#allocation4 + $0x180] sm:$0xff]
    %v1107 = vld [vmem:[#allocation4 + $0x188] sm:$0xff]
    %v1108 = vld [vmem:[#allocation4 + $0x190] sm:$0xff]
    %v1109 = vld [vmem:[#allocation4 + $0x198] sm:$0xff]
    %v1110 = vld [vmem:[#allocation4 + $0x1a0] sm:$0xff]
    %v1111 = vld [vmem:[#allocation4 + $0x1a8] sm:$0xff]
    %v1112 = vld [vmem:[#allocation4 + $0x1b0] sm:$0xff]
    %v1113 = vld [vmem:[#allocation4 + $0x1b8] sm:$0xff]
    %v1114 = vld [vmem:[#allocation4 + $0x1c0] sm:$0xff]
    %v1115 = vld [vmem:[#allocation4 + $0x1c8] sm:$0xff]
    %v1116 = vld [vmem:[#allocation4 + $0x1d0] sm:$0xff]
    %v1117 = vld [vmem:[#allocation4 + $0x1d8] sm:$0xff]
    %v1118 = vld [vmem:[#allocation4 + $0x1e0] sm:$0xff]
    %v1119 = vld [vmem:[#allocation4 + $0x1e8] sm:$0xff]
    %v1120 = vld [vmem:[#allocation4 + $0x1f0] sm:$0xff]
    %v1121 = vld [vmem:[#allocation4 + $0x1f8] sm:$0xff]
    %v1186 = vunpack.c.l.b16 %v1058
    %v1187 = vunpack.c.h.b16 %v1058
    %v1188 = vunpack.c.l.b16 %v1059
    %v1189 = vunpack.c.h.b16 %v1059
    %v1190 = vunpack.c.l.b16 %v1060
    %v1191 = vunpack.c.h.b16 %v1060
    %v1192 = vunpack.c.l.b16 %v1061
    %v1193 = vunpack.c.h.b16 %v1061
    %v1194 = vunpack.c.l.b16 %v1062
    %v1195 = vunpack.c.h.b16 %v1062
    %v1196 = vunpack.c.l.b16 %v1063
    %v1197 = vunpack.c.h.b16 %v1063
    %v1198 = vunpack.c.l.b16 %v1064
    %v1199 = vunpack.c.h.b16 %v1064
    %v1200 = vunpack.c.l.b16 %v1065
    %v1201 = vunpack.c.h.b16 %v1065
    %v1202 = vunpack.c.l.b16 %v1066
    %v1203 = vunpack.c.h.b16 %v1066
    %v1204 = vunpack.c.l.b16 %v1067
    %v1205 = vunpack.c.h.b16 %v1067
    %v1206 = vunpack.c.l.b16 %v1068
    %v1207 = vunpack.c.h.b16 %v1068
    %v1208 = vunpack.c.l.b16 %v1069
    %v1209 = vunpack.c.h.b16 %v1069
    %v1210 = vunpack.c.l.b16 %v1070
    %v1211 = vunpack.c.h.b16 %v1070
    %v1212 = vunpack.c.l.b16 %v1071
    %v1213 = vunpack.c.h.b16 %v1071
    %v1214 = vunpack.c.l.b16 %v1072
    %v1215 = vunpack.c.h.b16 %v1072
    %v1216 = vunpack.c.l.b16 %v1073
    %v1217 = vunpack.c.h.b16 %v1073
    %v1218 = vunpack.c.l.b16 %v1074
    %v1219 = vunpack.c.h.b16 %v1074
    %v1220 = vunpack.c.l.b16 %v1075
    %v1221 = vunpack.c.h.b16 %v1075
    %v1222 = vunpack.c.l.b16 %v1076
    %v1223 = vunpack.c.h.b16 %v1076
    %v1224 = vunpack.c.l.b16 %v1077
    %v1225 = vunpack.c.h.b16 %v1077
    %v1226 = vunpack.c.l.b16 %v1078
    %v1227 = vunpack.c.h.b16 %v1078
    %v1228 = vunpack.c.l.b16 %v1079
    %v1229 = vunpack.c.h.b16 %v1079
    %v1230 = vunpack.c.l.b16 %v1080
    %v1231 = vunpack.c.h.b16 %v1080
    %v1232 = vunpack.c.l.b16 %v1081
    %v1233 = vunpack.c.h.b16 %v1081
    %v1234 = vunpack.c.l.b16 %v1082
    %v1235 = vunpack.c.h.b16 %v1082
    %v1236 = vunpack.c.l.b16 %v1083
    %v1237 = vunpack.c.h.b16 %v1083
    %v1238 = vunpack.c.l.b16 %v1084
    %v1239 = vunpack.c.h.b16 %v1084
    %v1240 = vunpack.c.l.b16 %v1085
    %v1241 = vunpack.c.h.b16 %v1085
    %v1242 = vunpack.c.l.b16 %v1086
    %v1243 = vunpack.c.h.b16 %v1086
    %v1244 = vunpack.c.l.b16 %v1087
    %v1245 = vunpack.c.h.b16 %v1087
    %v1246 = vunpack.c.l.b16 %v1088
    %v1247 = vunpack.c.h.b16 %v1088
    %v1248 = vunpack.c.l.b16 %v1089
    %v1249 = vunpack.c.h.b16 %v1089
    %v1250 = vunpack.c.l.b16 %v1090
    %v1251 = vunpack.c.h.b16 %v1090
    %v1252 = vunpack.c.l.b16 %v1091
    %v1253 = vunpack.c.h.b16 %v1091
    %v1254 = vunpack.c.l.b16 %v1092
    %v1255 = vunpack.c.h.b16 %v1092
    %v1256 = vunpack.c.l.b16 %v1093
    %v1257 = vunpack.c.h.b16 %v1093
    %v1258 = vunpack.c.l.b16 %v1094
    %v1259 = vunpack.c.h.b16 %v1094
    %v1260 = vunpack.c.l.b16 %v1095
    %v1261 = vunpack.c.h.b16 %v1095
    %v1262 = vunpack.c.l.b16 %v1096
    %v1263 = vunpack.c.h.b16 %v1096
    %v1264 = vunpack.c.l.b16 %v1097
    %v1265 = vunpack.c.h.b16 %v1097
    %v1266 = vunpack.c.l.b16 %v1098
    %v1267 = vunpack.c.h.b16 %v1098
    %v1268 = vunpack.c.l.b16 %v1099
    %v1269 = vunpack.c.h.b16 %v1099
    %v1270 = vunpack.c.l.b16 %v1100
    %v1271 = vunpack.c.h.b16 %v1100
    %v1272 = vunpack.c.l.b16 %v1101
    %v1273 = vunpack.c.h.b16 %v1101
    %v1274 = vunpack.c.l.b16 %v1102
    %v1275 = vunpack.c.h.b16 %v1102
    %v1276 = vunpack.c.l.b16 %v1103
    %v1277 = vunpack.c.h.b16 %v1103
    %v1278 = vunpack.c.l.b16 %v1104
    %v1279 = vunpack.c.h.b16 %v1104
    %v1280 = vunpack.c.l.b16 %v1105
    %v1281 = vunpack.c.h.b16 %v1105
    %v1282 = vunpack.c.l.b16 %v1106
    %v1283 = vunpack.c.h.b16 %v1106
    %v1284 = vunpack.c.l.b16 %v1107
    %v1285 = vunpack.c.h.b16 %v1107
    %v1286 = vunpack.c.l.b16 %v1108
    %v1287 = vunpack.c.h.b16 %v1108
    %v1288 = vunpack.c.l.b16 %v1109
    %v1289 = vunpack.c.h.b16 %v1109
    %v1290 = vunpack.c.l.b16 %v1110
    %v1291 = vunpack.c.h.b16 %v1110
    %v1292 = vunpack.c.l.b16 %v1111
    %v1293 = vunpack.c.h.b16 %v1111
    %v1294 = vunpack.c.l.b16 %v1112
    %v1295 = vunpack.c.h.b16 %v1112
    %v1296 = vunpack.c.l.b16 %v1113
    %v1297 = vunpack.c.h.b16 %v1113
    %v1298 = vunpack.c.l.b16 %v1114
    %v1299 = vunpack.c.h.b16 %v1114
    %v1300 = vunpack.c.l.b16 %v1115
    %v1301 = vunpack.c.h.b16 %v1115
    %v1302 = vunpack.c.l.b16 %v1116
    %v1303 = vunpack.c.h.b16 %v1116
    %v1304 = vunpack.c.l.b16 %v1117
    %v1305 = vunpack.c.h.b16 %v1117
    %v1306 = vunpack.c.l.b16 %v1118
    %v1307 = vunpack.c.h.b16 %v1118
    %v1308 = vunpack.c.l.b16 %v1119
    %v1309 = vunpack.c.h.b16 %v1119
    %v1310 = vunpack.c.l.b16 %v1120
    %v1311 = vunpack.c.h.b16 %v1120
    %v1312 = vunpack.c.l.b16 %v1121
    %v1313 = vunpack.c.h.b16 %v1121
    %v1314 = vpack.c.b16 %v1190, %v1186
    %v1315 = vpack.c.b16 %v1191, %v1187
    %v1316 = vpack.c.b16 %v1192, %v1188
    %v1317 = vpack.c.b16 %v1193, %v1189
    %v1318 = vpack.c.b16 %v1198, %v1194
    %v1319 = vpack.c.b16 %v1199, %v1195
    %v1320 = vpack.c.b16 %v1200, %v1196
    %v1321 = vpack.c.b16 %v1201, %v1197
    %v1322 = vpack.c.b16 %v1206, %v1202
    %v1323 = vpack.c.b16 %v1207, %v1203
    %v1324 = vpack.c.b16 %v1208, %v1204
    %v1325 = vpack.c.b16 %v1209, %v1205
    %v1326 = vpack.c.b16 %v1214, %v1210
    %v1327 = vpack.c.b16 %v1215, %v1211
    %v1328 = vpack.c.b16 %v1216, %v1212
    %v1329 = vpack.c.b16 %v1217, %v1213
    %v1330 = vpack.c.b16 %v1222, %v1218
    %v1331 = vpack.c.b16 %v1223, %v1219
    %v1332 = vpack.c.b16 %v1224, %v1220
    %v1333 = vpack.c.b16 %v1225, %v1221
    %v1334 = vpack.c.b16 %v1230, %v1226
    %v1335 = vpack.c.b16 %v1231, %v1227
    %v1336 = vpack.c.b16 %v1232, %v1228
    %v1337 = vpack.c.b16 %v1233, %v1229
    %v1338 = vpack.c.b16 %v1238, %v1234
    %v1339 = vpack.c.b16 %v1239, %v1235
    %v1340 = vpack.c.b16 %v1240, %v1236
    %v1341 = vpack.c.b16 %v1241, %v1237
    %v1342 = vpack.c.b16 %v1246, %v1242
    %v1343 = vpack.c.b16 %v1247, %v1243
    %v1344 = vpack.c.b16 %v1248, %v1244
    %v1345 = vpack.c.b16 %v1249, %v1245
    %v1346 = vpack.c.b16 %v1254, %v1250
    %v1347 = vpack.c.b16 %v1255, %v1251
    %v1348 = vpack.c.b16 %v1256, %v1252
    %v1349 = vpack.c.b16 %v1257, %v1253
    %v1350 = vpack.c.b16 %v1262, %v1258
    %v1351 = vpack.c.b16 %v1263, %v1259
    %v1352 = vpack.c.b16 %v1264, %v1260
    %v1353 = vpack.c.b16 %v1265, %v1261
    %v1354 = vpack.c.b16 %v1270, %v1266
    %v1355 = vpack.c.b16 %v1271, %v1267
    %v1356 = vpack.c.b16 %v1272, %v1268
    %v1357 = vpack.c.b16 %v1273, %v1269
    %v1358 = vpack.c.b16 %v1278, %v1274
    %v1359 = vpack.c.b16 %v1279, %v1275
    %v1360 = vpack.c.b16 %v1280, %v1276
    %v1361 = vpack.c.b16 %v1281, %v1277
    %v1362 = vpack.c.b16 %v1286, %v1282
    %v1363 = vpack.c.b16 %v1287, %v1283
    %v1364 = vpack.c.b16 %v1288, %v1284
    %v1365 = vpack.c.b16 %v1289, %v1285
    %v1366 = vpack.c.b16 %v1294, %v1290
    %v1367 = vpack.c.b16 %v1295, %v1291
    %v1368 = vpack.c.b16 %v1296, %v1292
    %v1369 = vpack.c.b16 %v1297, %v1293
    %v1370 = vpack.c.b16 %v1302, %v1298
    %v1371 = vpack.c.b16 %v1303, %v1299
    %v1372 = vpack.c.b16 %v1304, %v1300
    %v1373 = vpack.c.b16 %v1305, %v1301
    %v1374 = vpack.c.b16 %v1310, %v1306
    %v1375 = vpack.c.b16 %v1311, %v1307
    %v1376 = vpack.c.b16 %v1312, %v1308
    %v1377 = vpack.c.b16 %v1313, %v1309
    %1442 = vmatprep.subr.bf16.mxu0 %v1343
    %1443 = vmatpush1.bf16.msra.mxu0 %v1342
    %1444 = vmatprep.subr.bf16.mxu0 %v1339
    %1445 = vmatpush1.bf16.msra.mxu0 %v1338
    %1446 = vmatprep.subr.bf16.mxu0 %v1335
    %1447 = vmatpush1.bf16.msra.mxu0 %v1334
    %1448 = vmatprep.subr.bf16.mxu0 %v1331
    %1449 = vmatpush1.bf16.msra.mxu0 %v1330
    %1450 = vmatprep.subr.bf16.mxu0 %v1327
    %1451 = vmatpush1.bf16.msra.mxu0 %v1326
    %1452 = vmatprep.subr.bf16.mxu0 %v1323
    %1453 = vmatpush1.bf16.msra.mxu0 %v1322
    %1454 = vmatprep.subr.bf16.mxu0 %v1319
    %1455 = vmatpush1.bf16.msra.mxu0 %v1318
    %1456 = vmatprep.subr.bf16.mxu0 %v1315
    %1457 = vmatpush1.bf16.msra.mxu0 %v1314
    %1458 = vmatprep.subr.bf16.mxu0 %v1375
    %1459 = vmatpush2.bf16.msra.mxu0 %v1374
    %1460 = vmatprep.subr.bf16.mxu0 %v1371
    %1461 = vmatpush2.bf16.msra.mxu0 %v1370
    %1462 = vmatprep.subr.bf16.mxu0 %v1367
    %1463 = vmatpush2.bf16.msra.mxu0 %v1366
    %1464 = vmatprep.subr.bf16.mxu0 %v1363
    %1465 = vmatpush2.bf16.msra.mxu0 %v1362
    %1466 = vmatprep.subr.bf16.mxu0 %v1359
    %1467 = vmatpush2.bf16.msra.mxu0 %v1358
    %1468 = vmatprep.subr.bf16.mxu0 %v1355
    %1469 = vmatpush2.bf16.msra.mxu0 %v1354
    %1470 = vmatprep.subr.bf16.mxu0 %v1351
    %1471 = vmatpush2.bf16.msra.mxu0 %v1350
    %1472 = vmatprep.subr.bf16.mxu0 %v1347
    %1473 = vmatpush2.bf16.msra.mxu0 %v1346
    %1474 = vmatprep.mubr.bf16.mxu0 %v1057
    %1475 = vmatmul.mubr.bf16.gmra.mxu0 %v1056
    %v1476 = vpop.f32.mrf.mxu0
    %v1477 = vadd.f32 0.0, %v1476
    %v1478 = vpop.f32.mrf.mxu0
    %v1479 = vadd.f32 0.0, %v1478
    %v1480 = vpop.f32.mrf.mxu0
    %v1481 = vpop.f32.mrf.mxu0
    %1482 = vdwg.mxu0
    %1483 = vmatprep.subr.bf16.mxu0 %v1345
    %1484 = vmatpush1.bf16.msra.mxu0 %v1344
    %1485 = vmatprep.subr.bf16.mxu0 %v1341
    %1486 = vmatpush1.bf16.msra.mxu0 %v1340
    %1487 = vmatprep.subr.bf16.mxu0 %v1337
    %1488 = vmatpush1.bf16.msra.mxu0 %v1336
    %1489 = vmatprep.subr.bf16.mxu0 %v1333
    %1490 = vmatpush1.bf16.msra.mxu0 %v1332
    %1491 = vmatprep.subr.bf16.mxu0 %v1329
    %1492 = vmatpush1.bf16.msra.mxu0 %v1328
    %1493 = vmatprep.subr.bf16.mxu0 %v1325
    %1494 = vmatpush1.bf16.msra.mxu0 %v1324
    %1495 = vmatprep.subr.bf16.mxu0 %v1321
    %1496 = vmatpush1.bf16.msra.mxu0 %v1320
    %1497 = vmatprep.subr.bf16.mxu0 %v1317
    %1498 = vmatpush1.bf16.msra.mxu0 %v1316
    %1499 = vmatprep.subr.bf16.mxu0 %v1377
    %1500 = vmatpush2.bf16.msra.mxu0 %v1376
    %1501 = vmatprep.subr.bf16.mxu0 %v1373
    %1502 = vmatpush2.bf16.msra.mxu0 %v1372
    %1503 = vmatprep.subr.bf16.mxu0 %v1369
    %1504 = vmatpush2.bf16.msra.mxu0 %v1368
    %1505 = vmatprep.subr.bf16.mxu0 %v1365
    %1506 = vmatpush2.bf16.msra.mxu0 %v1364
    %1507 = vmatprep.subr.bf16.mxu0 %v1361
    %1508 = vmatpush2.bf16.msra.mxu0 %v1360
    %1509 = vmatprep.subr.bf16.mxu0 %v1357
    %1510 = vmatpush2.bf16.msra.mxu0 %v1356
    %1511 = vmatprep.subr.bf16.mxu0 %v1353
    %1512 = vmatpush2.bf16.msra.mxu0 %v1352
    %1513 = vmatprep.subr.bf16.mxu0 %v1349
    %1514 = vmatpush2.bf16.msra.mxu0 %v1348
    %1515 = vmatprep.mubr.bf16.mxu0 %v1057
    %1516 = vmatmul.mubr.bf16.gmra.mxu0 %v1056
    %v1517 = vpop.f32.mrf.mxu0
    %v1518 = vadd.f32 0.0, %v1517
    %v1519 = vpop.f32.mrf.mxu0
    %v1520 = vadd.f32 0.0, %v1519
    %v1521 = vpop.f32.mrf.mxu0
    %v1522 = vpop.f32.mrf.mxu0
    %1523 = vdwg.mxu0
    %v1524 = vmax.f32 %v1477, %v1479
    %v1525 = vmax.f32 %v1524, %v1518
    %v1526 = vmax.f32 %v1525, %v1520
    %v1527 = vld [vmem:[%s4] sm:$0x1]
    %v1529 = vlaneseq
    %v1530 = vshrl.u32 %v1529, 7
    %v1531 = vsub.s32 0, %v1530
    %v1532 = vrot.slane %v1527, %v1531
    %v1534 = vadd.f32 %v1526, %v1532
    %v1535 = vmax.f32 %v1534, 0.0
    %v1536 = vpack.c.bf16 %v1535, %v1535
    %v1537 = vld [vmem:[#allocation6] sm:$0xf]
    %v1538 = vld [vmem:[#allocation6 + $0x4] sm:$0xf]
    %v1539 = vld [vmem:[#allocation6 + $0x8] sm:$0xf]
    %v1540 = vld [vmem:[#allocation6 + $0xc] sm:$0xf]
    %v1541 = vld [vmem:[#allocation6 + $0x10] sm:$0xf]
    %v1542 = vld [vmem:[#allocation6 + $0x14] sm:$0xf]
    %v1543 = vld [vmem:[#allocation6 + $0x18] sm:$0xf]
    %v1544 = vld [vmem:[#allocation6 + $0x1c] sm:$0xf]
    %v1545 = vld [vmem:[#allocation6 + $0x20] sm:$0xf]
    %v1546 = vld [vmem:[#allocation6 + $0x24] sm:$0xf]
    %v1547 = vld [vmem:[#allocation6 + $0x28] sm:$0xf]
    %v1548 = vld [vmem:[#allocation6 + $0x2c] sm:$0xf]
    %v1549 = vld [vmem:[#allocation6 + $0x30] sm:$0xf]
    %v1550 = vld [vmem:[#allocation6 + $0x34] sm:$0xf]
    %v1551 = vld [vmem:[#allocation6 + $0x38] sm:$0xf]
    %v1552 = vld [vmem:[#allocation6 + $0x3c] sm:$0xf]
    %v1553 = vld [vmem:[%s6] sm:$0x1]
    %v1555 = vlaneseq
    %v1556 = vshrl.u32 %v1555, 7
    %v1557 = vsub.s32 0, %v1556
    %v1558 = vrot.slane %v1553, %v1557
    %v1576 = vunpack.c.l.b16 %v1537
    %v1577 = vunpack.c.l.b16 %v1538
    %v1578 = vunpack.c.l.b16 %v1539
    %v1579 = vunpack.c.l.b16 %v1540
    %v1580 = vunpack.c.l.b16 %v1541
    %v1581 = vunpack.c.l.b16 %v1542
    %v1582 = vunpack.c.l.b16 %v1543
    %v1583 = vunpack.c.l.b16 %v1544
    %v1584 = vunpack.c.l.b16 %v1545
    %v1585 = vunpack.c.l.b16 %v1546
    %v1586 = vunpack.c.l.b16 %v1547
    %v1587 = vunpack.c.l.b16 %v1548
    %v1588 = vunpack.c.l.b16 %v1549
    %v1589 = vunpack.c.l.b16 %v1550
    %v1590 = vunpack.c.l.b16 %v1551
    %v1591 = vunpack.c.l.b16 %v1552
    %v1592 = vpack.c.b16 %v1577, %v1576
    %v1593 = vpack.c.b16 %v1579, %v1578
    %v1594 = vpack.c.b16 %v1581, %v1580
    %v1595 = vpack.c.b16 %v1583, %v1582
    %v1596 = vpack.c.b16 %v1585, %v1584
    %v1597 = vpack.c.b16 %v1587, %v1586
    %v1598 = vpack.c.b16 %v1589, %v1588
    %v1599 = vpack.c.b16 %v1591, %v1590
    %1608 = vmatprep.subr.bf16.mxu0 0
    %1609 = vmatpush1.bf16.msra.mxu0 %v1599
    %1610 = vmatprep.subr.bf16.mxu0 0
    %1611 = vmatpush1.bf16.msra.mxu0 %v1598
    %1612 = vmatprep.subr.bf16.mxu0 0
    %1613 = vmatpush1.bf16.msra.mxu0 %v1597
    %1614 = vmatprep.subr.bf16.mxu0 0
    %1615 = vmatpush1.bf16.msra.mxu0 %v1596
    %1616 = vmatprep.subr.bf16.mxu0 0
    %1617 = vmatpush1.bf16.msra.mxu0 %v1595
    %1618 = vmatprep.subr.bf16.mxu0 0
    %1619 = vmatpush1.bf16.msra.mxu0 %v1594
    %1620 = vmatprep.subr.bf16.mxu0 0
    %1621 = vmatpush1.bf16.msra.mxu0 %v1593
    %1622 = vmatprep.subr.bf16.mxu0 0
    %1623 = vmatpush1.bf16.msra.mxu0 %v1592
    %1624 = vmatprep.subr.bf16.mxu0 0
    %1625 = vmatpush2.bf16.msra.mxu0 0
    %1626 = vmatprep.subr.bf16.mxu0 0
    %1627 = vmatpush2.bf16.msra.mxu0 0
    %1628 = vmatprep.subr.bf16.mxu0 0
    %1629 = vmatpush2.bf16.msra.mxu0 0
    %1630 = vmatprep.subr.bf16.mxu0 0
    %1631 = vmatpush2.bf16.msra.mxu0 0
    %1632 = vmatprep.subr.bf16.mxu0 0
    %1633 = vmatpush2.bf16.msra.mxu0 0
    %1634 = vmatprep.subr.bf16.mxu0 0
    %1635 = vmatpush2.bf16.msra.mxu0 0
    %1636 = vmatprep.subr.bf16.mxu0 0
    %1637 = vmatpush2.bf16.msra.mxu0 0
    %1638 = vmatprep.subr.bf16.mxu0 0
    %1639 = vmatpush2.bf16.msra.mxu0 0
    %1640 = vmatprep.mubr.bf16.mxu0 0
    %1641 = vmatmul.mubr.bf16.gmra.mxu0 %v1536
    %v1642 = vpop.f32.mrf.mxu0
    %v1643 = vadd.f32 %v1558, %v1642
    %v1644 = vpop.f32.mrf.mxu0
    %v1645 = vpop.f32.mrf.mxu0
    %v1646 = vpop.f32.mrf.mxu0
    %1647 = vdwg.mxu0
    %v1648 = vmax.f32 %v1643, 0.0
    %v1649 = vld [vmem:[#allocation7] sm:$0xff]
    %v1650 = vld [vmem:[#allocation7 + $0x8] sm:$0xff]
    %v1651 = vld [vmem:[#allocation7 + $0x10] sm:$0xff]
    %v1652 = vld [vmem:[#allocation7 + $0x18] sm:$0xff]
    %v1653 = vld [vmem:[#allocation7 + $0x20] sm:$0xff]
    %v1654 = vld [vmem:[#allocation7 + $0x28] sm:$0xff]
    %v1655 = vld [vmem:[#allocation7 + $0x30] sm:$0xff]
    %v1656 = vld [vmem:[#allocation7 + $0x38] sm:$0xff]
    %v1657 = vld [vmem:[#allocation7 + $0x40] sm:$0xff]
    %v1658 = vld [vmem:[#allocation7 + $0x48] sm:$0xff]
    %v1659 = vld [vmem:[#allocation7 + $0x50] sm:$0xff]
    %v1660 = vld [vmem:[#allocation7 + $0x58] sm:$0xff]
    %v1661 = vld [vmem:[#allocation7 + $0x60] sm:$0xff]
    %v1662 = vld [vmem:[#allocation7 + $0x68] sm:$0xff]
    %v1663 = vld [vmem:[#allocation7 + $0x70] sm:$0xff]
    %v1664 = vld [vmem:[#allocation7 + $0x78] sm:$0xff]
    %v1665 = vld [vmem:[%s8] sm:$0x1]
    %v1667 = vlaneseq
    %v1668 = vshrl.u32 %v1667, 7
    %v1669 = vsub.s32 0, %v1668
    %v1670 = vrot.slane %v1665, %v1669
    %1672 = vmatprep.subr.mxu0 0.0
    %1673 = vmatpush1.msra.mxu0 %v1664
    %1674 = vmatprep.subr.mxu0 0.0
    %1675 = vmatpush1.msra.mxu0 %v1663
    %1676 = vmatprep.subr.mxu0 0.0
    %1677 = vmatpush1.msra.mxu0 %v1662
    %1678 = vmatprep.subr.mxu0 0.0
    %1679 = vmatpush1.msra.mxu0 %v1661
    %1680 = vmatprep.subr.mxu0 0.0
    %1681 = vmatpush1.msra.mxu0 %v1660
    %1682 = vmatprep.subr.mxu0 0.0
    %1683 = vmatpush1.msra.mxu0 %v1659
    %1684 = vmatprep.subr.mxu0 0.0
    %1685 = vmatpush1.msra.mxu0 %v1658
    %1686 = vmatprep.subr.mxu0 0.0
    %1687 = vmatpush1.msra.mxu0 %v1657
    %1688 = vmatprep.subr.mxu0 0.0
    %1689 = vmatpush1.msra.mxu0 %v1656
    %1690 = vmatprep.subr.mxu0 0.0
    %1691 = vmatpush1.msra.mxu0 %v1655
    %1692 = vmatprep.subr.mxu0 0.0
    %1693 = vmatpush1.msra.mxu0 %v1654
    %1694 = vmatprep.subr.mxu0 0.0
    %1695 = vmatpush1.msra.mxu0 %v1653
    %1696 = vmatprep.subr.mxu0 0.0
    %1697 = vmatpush1.msra.mxu0 %v1652
    %1698 = vmatprep.subr.mxu0 0.0
    %1699 = vmatpush1.msra.mxu0 %v1651
    %1700 = vmatprep.subr.mxu0 0.0
    %1701 = vmatpush1.msra.mxu0 %v1650
    %1702 = vmatprep.subr.mxu0 0.0
    %1703 = vmatpush1.msra.mxu0 %v1649
    %1704 = vmatprep.subr.mxu0 0.0
    %1705 = vmatpush2.msra.mxu0 0.0
    %1706 = vmatprep.subr.mxu0 0.0
    %1707 = vmatpush2.msra.mxu0 0.0
    %1708 = vmatprep.subr.mxu0 0.0
    %1709 = vmatpush2.msra.mxu0 0.0
    %1710 = vmatprep.subr.mxu0 0.0
    %1711 = vmatpush2.msra.mxu0 0.0
    %1712 = vmatprep.subr.mxu0 0.0
    %1713 = vmatpush2.msra.mxu0 0.0
    %1714 = vmatprep.subr.mxu0 0.0
    %1715 = vmatpush2.msra.mxu0 0.0
    %1716 = vmatprep.subr.mxu0 0.0
    %1717 = vmatpush2.msra.mxu0 0.0
    %1718 = vmatprep.subr.mxu0 0.0
    %1719 = vmatpush2.msra.mxu0 0.0
    %1720 = vmatprep.subr.mxu0 0.0
    %1721 = vmatpush2.msra.mxu0 0.0
    %1722 = vmatprep.subr.mxu0 0.0
    %1723 = vmatpush2.msra.mxu0 0.0
    %1724 = vmatprep.subr.mxu0 0.0
    %1725 = vmatpush2.msra.mxu0 0.0
    %1726 = vmatprep.subr.mxu0 0.0
    %1727 = vmatpush2.msra.mxu0 0.0
    %1728 = vmatprep.subr.mxu0 0.0
    %1729 = vmatpush2.msra.mxu0 0.0
    %1730 = vmatprep.subr.mxu0 0.0
    %1731 = vmatpush2.msra.mxu0 0.0
    %1732 = vmatprep.subr.mxu0 0.0
    %1733 = vmatpush2.msra.mxu0 0.0
    %1734 = vmatprep.subr.mxu0 0.0
    %1735 = vmatpush2.msra.mxu0 0.0
    %1736 = vmatprep.mubr.f32.mxu0 0.0
    %1737 = vmatmul.mubr.f32.gmra.mxu0 %v1648
    %v1738 = vpop.f32.mrf.mxu0
    %v1739 = vadd.f32 %v1670, %v1738
    %v1740 = vpop.f32.mrf.mxu0
    %1741 = vdwg.mxu0
    %v1742 = vxor.u32 %v1739, 2147483648
    %v1743 = vmul.f32 %v1742, 1.442695
    %v1744 = vpow.pop %v1743
    %v1745 = vadd.f32 %v1744, 1.0
    %v1746 = vrcp.pop %v1745
    %v1747 = vmul.f32 1.0, %v1746
    %vm1748 = vcmask 1024
    %1749 = vst.msk [vmem:[%s9] sm:$0x3] %vm1748, %v1747
    // Predicated region
    $region54: #{cnn_forward.1} parent=1 // pred_check
      _
    $region55: #{cnn_forward.1} parent=1 // pred_check_branch
      %1751 = sbr.rel (0) target = $region57
    $region56: #{cnn_forward.1} parent=1 // pred_region
      _
    $region57: #{cnn_forward.1} parent=1 // pred_fallthru
      _
    // Predicated region
    $region58: #{cnn_forward.1} parent=1 // pred_check
      _
    $region59: #{cnn_forward.1} parent=1 // pred_check_branch
      %1753 = sbr.rel (0) target = $region61
    $region60: #{cnn_forward.1} parent=1 // pred_region
      _
    $region61: #{cnn_forward.1} parent=1 // pred_fallthru
      _
    %1754 = vsyncpa [#allocation3], 1
    %1755 = vsyncpa [#allocation5], 1
    %1756 = vsyncpa [#allocation8], 1

</llo_original>
